<compile_context>
chip_gen: v6e
topology: v6e:2x2x1
jax: 0.10.0
libtpu: 0.0.40
codegen_flags: <defaults>
</compile_context>

<pallas_src>
import functools

import jax
import jax.numpy as jnp
from jax.experimental import pallas as pl
from jax.experimental.pallas import tpu as pltpu

H = 32          # hidden size
D_FEAT = 16     # audio feature dim
V = 16          # vocab size
V_PAD = 128     # lane-padded vocab (full 128-lane logit stores)
LANE = 128      # lane-padded attention width
SUB = 8         # sublane granularity
NEG_INF = -1e9
WORD_PADDING_IDX = 0

_VMEM = pl.BlockSpec(memory_space=pltpu.MemorySpace.VMEM)


def _round_up(n, m):
    return ((n + m - 1) // m) * m


# ----------------------------------------------------------------------------
# In-kernel helpers (traced inside the fused kernels; jnp/lax ops only)
# ----------------------------------------------------------------------------
def _onehot(ids_col, v):
    """ids_col: (N, 1) int32 -> (N, v) f32 one-hot (MXU-friendly, no gather)."""
    n = ids_col.shape[0]
    iota = jax.lax.broadcasted_iota(jnp.int32, (n, v), 1)
    return jnp.where(ids_col == iota, 1.0, 0.0).astype(jnp.float32)


def _pad_eye(rows, cols):
    """(rows, cols) identity-ish matrix used to lane-pad narrow results via MXU."""
    r = jax.lax.broadcasted_iota(jnp.int32, (rows, cols), 0)
    c = jax.lax.broadcasted_iota(jnp.int32, (rows, cols), 1)
    return jnp.where(r == c, 1.0, 0.0).astype(jnp.float32)


def _encode(x_flat, b, tsp, ts_real, enc_wb):
    """x_flat: (B*TSP, D) batch-major -> memory_bank (B,TSP,H), enc_final (B,H)."""
    w = enc_wb[:D_FEAT]                       # (D, H)
    bias = enc_wb[D_FEAT:D_FEAT + 1]          # (1, H)
    mem = jnp.tanh(
        jnp.dot(x_flat, w, preferred_element_type=jnp.float32) + bias
    ).reshape(b, tsp, H)
    # TODO(synk): enc_final is a mean over (real) time steps standing in for the
    # RNN final state of the original injected encoder.
    if ts_real == tsp:
        final = jnp.sum(mem, axis=1) * (1.0 / ts_real)
    else:
        pos = jax.lax.broadcasted_iota(jnp.int32, (1, tsp, 1), 1)
        final = jnp.sum(jnp.where(pos < ts_real, mem, 0.0), axis=1) * (1.0 / ts_real)
    return mem, final


def _decode(emb_flat, mem, final, add_mask, eye, wq, wcg, wob, b, tdp):
    """One synthetic attentional decoder.

    emb_flat: (B*Tdp, H) feed embeddings (batch-major flat, sublane-aligned)
    mem: (B, TSP, H), final: (B, H), add_mask: None or broadcastable (.,1,TSP)
    Returns logits (B, Tdp, V_PAD) and lane-padded attention (B, Tdp, LANE).
    """
    tsp = mem.shape[1]
    n = b * tdp
    wo = wob[:H]                              # (H, V_PAD)
    bo = wob[H:H + 1]                         # (1, V_PAD)

    # TODO(synk): the original decoders are recurrent; here the state
    # conditioning is a feed-forward projection of enc_final at every step.
    q = jnp.tanh(
        jnp.dot(emb_flat, wq, preferred_element_type=jnp.float32).reshape(b, tdp, H)
        + final[:, None, :])                                            # (B,Tdp,H)

    # Luong-style dot attention over source positions (exact softmax)
    scores = jnp.einsum('bqh,bkh->bqk', q, mem,
                        preferred_element_type=jnp.float32)             # (B,Tdp,TSP)
    if add_mask is not None:
        scores = scores + add_mask
    scores = scores - jnp.max(scores, axis=-1, keepdims=True)
    e = jnp.exp(scores)
    attn = e / jnp.sum(e, axis=-1, keepdims=True)

    ctx = jnp.einsum('bqk,bkh->bqh', attn, mem,
                     preferred_element_type=jnp.float32)                # (B,Tdp,H)

    # fused wc/wg projection: one (N, 2H) @ (2H, H) matmul
    cq = jnp.concatenate([ctx.reshape(n, H), q.reshape(n, H)], axis=-1)
    combined = jnp.tanh(jnp.dot(cq, wcg, preferred_element_type=jnp.float32))

    logits = (jnp.dot(combined, wo, preferred_element_type=jnp.float32) + bo
              ).reshape(b, tdp, V_PAD)
    # lane-pad attention to 128 via tiny identity matmul -> full-lane stores
    attn_pad = jnp.dot(attn.reshape(n, tsp), eye,
                       preferred_element_type=jnp.float32).reshape(b, tdp, LANE)
    return logits, attn_pad


# ----------------------------------------------------------------------------
# Fused kernels (one pallas_call per task: encoder + both decoders)
# ----------------------------------------------------------------------------
def _fused_main_kernel(x_ref, ids_ref, dec_emb_ref, enc_wb_ref,
                       wq_ref, wcg_ref, wob_ref,
                       logits_s_ref, attn_s_ref, logits_t_ref, attn_t_ref,
                       *, ts_real, tdp_s, tdp_t):
    b, tsp, d = x_ref.shape
    x_flat = x_ref[...].reshape(b * tsp, d)
    mem, final = _encode(x_flat, b, tsp, ts_real, enc_wb_ref[...])

    # 'main' task: torch zeroes the mask -> no source masking (only synthetic
    # time-padding positions get masked, which never exist in the demo).
    if ts_real == tsp:
        add_mask = None
    else:
        kpos = jax.lax.broadcasted_iota(jnp.int32, (1, 1, tsp), 2)
        add_mask = jnp.where(kpos >= ts_real, NEG_INF, 0.0)

    # single shared one-hot embedding for both decoders' feeds
    emb_all = jnp.dot(_onehot(ids_ref[...], V), dec_emb_ref[...],
                      preferred_element_type=jnp.float32)               # (NS+NT, H)
    eye = _pad_eye(tsp, LANE)

    ns = b * tdp_s
    lo, at = _decode(emb_all[:ns], mem, final, add_mask, eye,
                     wq_ref[0], wcg_ref[0], wob_ref[0], b, tdp_s)
    logits_s_ref[...] = lo
    attn_s_ref[...] = at

    lo, at = _decode(emb_all[ns:], mem, final, add_mask, eye,
                     wq_ref[1], wcg_ref[1], wob_ref[1], b, tdp_t)
    logits_t_ref[...] = lo
    attn_t_ref[...] = at


def _fused_text_kernel(ids_ref, mask_ref, txt_emb_ref, dec_emb_ref, enc_wb_ref,
                       wq_ref, wcg_ref, wob_ref,
                       logits_s_ref, attn_s_ref, logits_t_ref, attn_t_ref,
                       *, ts_real, tdp_s, tdp_t):
    b, tsp = mask_ref.shape
    # one shared one-hot for encoder ids + both decoder feeds
    oh = _onehot(ids_ref[...], V)                                        # (Ntot, V)
    ne = b * tsp
    # TODO(synk): padding_idx embedding row is not zeroed (torch nn.Embedding
    # with padding_idx would be); acceptable for the synthetic stand-in.
    x_flat = jnp.dot(oh[:ne], txt_emb_ref[...],
                     preferred_element_type=jnp.float32)                 # (B*TSP, D)
    mem, final = _encode(x_flat, b, tsp, ts_real, enc_wb_ref[...])
    emb_all = jnp.dot(oh[ne:], dec_emb_ref[...],
                      preferred_element_type=jnp.float32)                # (NS+NT, H)

    add_mask = mask_ref[...][:, None, :] * NEG_INF                       # (B,1,TSP)
    eye = _pad_eye(tsp, LANE)

    ns = b * tdp_s
    lo, at = _decode(emb_all[:ns], mem, final, add_mask, eye,
                     wq_ref[0], wcg_ref[0], wob_ref[0], b, tdp_s)
    logits_s_ref[...] = lo
    attn_s_ref[...] = at

    lo, at = _decode(emb_all[ns:], mem, final, add_mask, eye,
                     wq_ref[1], wcg_ref[1], wob_ref[1], b, tdp_t)
    logits_t_ref[...] = lo
    attn_t_ref[...] = at


# ----------------------------------------------------------------------------
# Cost estimate + jitted wrappers
# ----------------------------------------------------------------------------
def _nbytes(arrs):
    total = 0
    for a in arrs:
        n = 1
        for dim in a.shape:
            n *= int(dim)
        total += n * jnp.dtype(a.dtype).itemsize
    return total


def _cost_estimate(b, tsp, tdp_s, tdp_t, n_emb_rows, text, in_bytes, out_bytes):
    flops = 2 * b * tsp * D_FEAT * H + 2 * n_emb_rows * V * H
    if text:
        flops += 2 * b * tsp * V * D_FEAT
    trans = b * tsp * H
    for tdp in (tdp_s, tdp_t):
        n = b * tdp
        flops += (2 * n * H * H               # wq
                  + 4 * b * tdp * tsp * H     # scores + context
                  + 2 * n * (2 * H) * H       # fused wc/wg
                  + 2 * n * H * V_PAD         # output projection
                  + 2 * n * tsp * LANE)       # attention lane-pad matmul
        trans += 2 * n * H + b * tdp * tsp
    return pl.CostEstimate(flops=flops, transcendentals=trans,
                           bytes_accessed=in_bytes + out_bytes)


def _feed_ids(tok, tdp):
    """(T, B, 1) tokens -> shifted feed (tok[:-1]) as (B*tdp, 1) int32, 0-padded."""
    td = tok.shape[0] - 1
    b = tok.shape[1]
    ids = jnp.transpose(tok[:-1, :, 0], (1, 0)).astype(jnp.int32)        # (B, td)
    ids = jnp.pad(ids, ((0, 0), (0, tdp - td)))
    return ids.reshape(b * tdp, 1)


@jax.jit
def _forward_main(params, feats, src, tgt):
    t, b, _ = feats.shape
    td_s, td_t = src.shape[0] - 1, tgt.shape[0] - 1
    tsp = _round_up(t, SUB)
    tdp_s, tdp_t = _round_up(td_s, SUB), _round_up(td_t, SUB)

    # tiny jitted prologue: batch-major / time-padded feats + ONE ids column
    x = jnp.transpose(feats, (1, 0, 2)).astype(jnp.float32)              # (B, T, D)
    if tsp > t:
        x = jnp.pad(x, ((0, 0), (0, tsp - t), (0, 0)))
    ids_all = jnp.concatenate([_feed_ids(src, tdp_s), _feed_ids(tgt, tdp_t)], axis=0)

    out_shape = (jax.ShapeDtypeStruct((b, tdp_s, V_PAD), jnp.float32),
                 jax.ShapeDtypeStruct((b, tdp_s, LANE), jnp.float32),
                 jax.ShapeDtypeStruct((b, tdp_t, V_PAD), jnp.float32),
                 jax.ShapeDtypeStruct((b, tdp_t, LANE), jnp.float32))

    inputs = (x, ids_all, params['dec_emb'], params['aud_enc_wb'],
              params['dec_wq'], params['dec_wcg'], params['dec_wob'])

    kernel = functools.partial(_fused_main_kernel,
                               ts_real=t, tdp_s=tdp_s, tdp_t=tdp_t)
    logits_s, attn_s, logits_t, attn_t = pl.pallas_call(
        kernel,
        out_shape=out_shape,
        in_specs=[_VMEM] * len(inputs),
        out_specs=(_VMEM,) * 4,
        cost_estimate=_cost_estimate(b, tsp, tdp_s, tdp_t, ids_all.shape[0], False,
                                     _nbytes(inputs), _nbytes(out_shape)),
    )(*inputs)

    return ((logits_s[:, :td_s, :V], attn_s[:, :td_s, :t]),
            (logits_t[:, :td_t, :V], attn_t[:, :td_t, :t]))


@jax.jit
def _forward_text(params, src, tgt):
    ts, b, _ = src.shape
    td_s, td_t = ts - 1, tgt.shape[0] - 1
    tsp = _round_up(ts, SUB)
    tdp_s, tdp_t = _round_up(td_s, SUB), _round_up(td_t, SUB)

    ids_bt = jnp.transpose(src[:, :, 0], (1, 0)).astype(jnp.int32)       # (B, Ts)
    enc_ids = jnp.pad(ids_bt, ((0, 0), (0, tsp - ts))).reshape(b * tsp, 1)
    mask_b = jnp.pad((ids_bt == WORD_PADDING_IDX).astype(jnp.float32),
                     ((0, 0), (0, tsp - ts)), constant_values=1.0)       # (B, TSP)
    ids_all = jnp.concatenate(
        [enc_ids, _feed_ids(src, tdp_s), _feed_ids(tgt, tdp_t)], axis=0)

    out_shape = (jax.ShapeDtypeStruct((b, tdp_s, V_PAD), jnp.float32),
                 jax.ShapeDtypeStruct((b, tdp_s, LANE), jnp.float32),
                 jax.ShapeDtypeStruct((b, tdp_t, V_PAD), jnp.float32),
                 jax.ShapeDtypeStruct((b, tdp_t, LANE), jnp.float32))

    inputs = (ids_all, mask_b, params['txt_emb'], params['dec_emb'],
              params['txt_enc_wb'],
              params['dec_wq'], params['dec_wcg'], params['dec_wob'])

    kernel = functools.partial(_fused_text_kernel,
                               ts_real=ts, tdp_s=tdp_s, tdp_t=tdp_t)
    logits_s, attn_s, logits_t, attn_t = pl.pallas_call(
        kernel,
        out_shape=out_shape,
        in_specs=[_VMEM] * len(inputs),
        out_specs=(_VMEM,) * 4,
        cost_estimate=_cost_estimate(b, tsp, tdp_s, tdp_t, ids_all.shape[0], True,
                                     _nbytes(inputs), _nbytes(out_shape)),
    )(*inputs)

    return ((logits_s[:, :td_s, :V], attn_s[:, :td_s, :ts]),
            (logits_t[:, :td_t, :V], attn_t[:, :td_t, :ts]))


# ----------------------------------------------------------------------------
# E2E model (synthetic stand-ins for the injected encoders/decoders)
# ----------------------------------------------------------------------------
class E2EModelPallas:
    """Synthetic E2EModel.  Decoder outputs are batch-major (B, Td, .)."""

    def __init__(self, key):
        ks = jax.random.split(key, 8)
        s = 0.1

        def dec_params(k):
            kk = jax.random.split(k, 5)
            wq = jax.random.normal(kk[0], (H, H), jnp.float32) * s
            wc = jax.random.normal(kk[1], (H, H), jnp.float32) * s
            wg = jax.random.normal(kk[2], (H, H), jnp.float32) * s
            wo = jax.random.normal(kk[3], (H, V), jnp.float32) * s
            bo = jax.random.normal(kk[4], (V,), jnp.float32) * s
            wcg = jnp.concatenate([wc, wg], axis=0)                      # (2H, H)
            wob = jnp.concatenate(
                [jnp.pad(wo, ((0, 0), (0, V_PAD - V))),
                 jnp.pad(bo, (0, V_PAD - V))[None, :]], axis=0)          # (H+1, V_PAD)
            return wq, wcg, wob

        wq_s, wcg_s, wob_s = dec_params(ks[6])
        wq_t, wcg_t, wob_t = dec_params(ks[7])

        aud_w = jax.random.normal(ks[0], (D_FEAT, H), jnp.float32) * s
        aud_b = jax.random.normal(ks[1], (H,), jnp.float32) * s
        txt_w = jax.random.normal(ks[3], (D_FEAT, H), jnp.float32) * s
        txt_b = jax.random.normal(ks[4], (H,), jnp.float32) * s

        self.word_padding_idx = WORD_PADDING_IDX
        self.params = {
            # encoder weight + bias packed (bias is last row)
            'aud_enc_wb': jnp.concatenate([aud_w, aud_b[None, :]], axis=0),
            'txt_enc_wb': jnp.concatenate([txt_w, txt_b[None, :]], axis=0),
            'txt_emb': jax.random.normal(ks[2], (V, D_FEAT), jnp.float32) * s,
            'dec_emb': jax.random.normal(ks[5], (V, H), jnp.float32) * s,
            # both decoders stacked along a leading dim of 2
            'dec_wq': jnp.stack([wq_s, wq_t]),       # (2, H, H)
            'dec_wcg': jnp.stack([wcg_s, wcg_t]),    # (2, 2H, H)
            'dec_wob': jnp.stack([wob_s, wob_t]),    # (2, H+1, V_PAD)
        }

    def forward(self, feats, feats_mask, src, tgt, task='main'):
        if task == 'main':
            assert feats is not None
            # torch: mask is re-zeroed for the main task -> no source masking
            return _forward_main(self.params, feats, src, tgt)
        elif task == 'text-only':
            assert feats is None
            return _forward_text(self.params, src, tgt)
        else:
            raise Exception('Unknown task "{}"'.format(task))


if __name__ == "__main__":
    key = jax.random.PRNGKey(0)
    k_model, k_feats, k_src, k_tgt = jax.random.split(key, 4)

    model = E2EModelPallas(k_model)

    T_SRC, B = 8, 2
    feats = jax.random.normal(k_feats, (T_SRC, B, D_FEAT), jnp.float32)
    feats_mask = jnp.zeros((T_SRC, B), jnp.float32)
    src = jax.random.randint(k_src, (6, B, 1), 1, V)   # token ids, pad_idx=0 unused
    tgt = jax.random.randint(k_tgt, (7, B, 1), 1, V)

    src_out, tgt_out = model.forward(feats, feats_mask, src, tgt, task='main')
    jax.block_until_ready((src_out, tgt_out))
    assert src_out[0].shape == (B, 5, V) and src_out[1].shape == (B, 5, T_SRC)
    assert tgt_out[0].shape == (B, 6, V) and tgt_out[1].shape == (B, 6, T_SRC)
    assert bool(jnp.all(jnp.isfinite(src_out[0]))) and bool(jnp.all(jnp.isfinite(tgt_out[0])))
    # exact softmax -> attention rows sum to 1
    assert bool(jnp.all(jnp.abs(jnp.sum(src_out[1], axis=-1) - 1.0) < 1e-4))
    assert bool(jnp.all(jnp.abs(jnp.sum(tgt_out[1], axis=-1) - 1.0) < 1e-4))

    # also exercise the text-only branch
    src_out2, tgt_out2 = model.forward(None, None, src, tgt, task='text-only')
    jax.block_until_ready((src_out2, tgt_out2))
    assert src_out2[0].shape == (B, 5, V) and src_out2[1].shape == (B, 5, 6)
    assert tgt_out2[0].shape == (B, 6, V) and tgt_out2[1].shape == (B, 6, 6)
    assert bool(jnp.all(jnp.isfinite(src_out2[0])))
    assert bool(jnp.all(jnp.abs(jnp.sum(src_out2[1], axis=-1) - 1.0) < 1e-4))

    print("KERNEL_OK")
</pallas_src>

<mosaic_0001>
module attributes {stable_mosaic.version = 11 : i64} {
  func.func @_fused_main_kernel(%arg0: memref<2x8x16xf32, #tpu.memory_space<vmem>>, %arg1: memref<32x1xi32, #tpu.memory_space<vmem>>, %arg2: memref<16x32xf32, #tpu.memory_space<vmem>>, %arg3: memref<17x32xf32, #tpu.memory_space<vmem>>, %arg4: memref<2x32x32xf32, #tpu.memory_space<vmem>>, %arg5: memref<2x64x32xf32, #tpu.memory_space<vmem>>, %arg6: memref<2x33x128xf32, #tpu.memory_space<vmem>>, %arg7: memref<2x8x128xf32, #tpu.memory_space<vmem>>, %arg8: memref<2x8x128xf32, #tpu.memory_space<vmem>>, %arg9: memref<2x8x128xf32, #tpu.memory_space<vmem>>, %arg10: memref<2x8x128xf32, #tpu.memory_space<vmem>>) attributes {dimension_semantics = [], scalar_prefetch = 0 : i64, scratch_operands = 0 : i64, tpu.core_type = #tpu.core_type<tc>} {
    %c0 = arith.constant 0 : index
    %c0_0 = arith.constant 0 : index
    %c0_1 = arith.constant 0 : index
    %0 = vector.load %arg0[%c0, %c0_0, %c0_1] : memref<2x8x16xf32, #tpu.memory_space<vmem>>, vector<2x8x16xf32>
    %1 = vector.shape_cast %0 : vector<2x8x16xf32> to vector<16x16xf32>
    %c0_2 = arith.constant 0 : index
    %c0_3 = arith.constant 0 : index
    %2 = vector.load %arg3[%c0_2, %c0_3] : memref<17x32xf32, #tpu.memory_space<vmem>>, vector<17x32xf32>
    %3 = vector.extract_strided_slice %2 {offsets = [0, 0], sizes = [16, 32], strides = [1, 1]} : vector<17x32xf32> to vector<16x32xf32>
    %4 = vector.extract_strided_slice %2 {offsets = [16, 0], sizes = [1, 32], strides = [1, 1]} : vector<17x32xf32> to vector<1x32xf32>
    %cst = arith.constant dense<0.000000e+00> : vector<16x32xf32>
    %5 = tpu.matmul %1, %3, %cst {dimension_numbers = #tpu.dot_dimension_numbers<[1], [0], [0], [1], [0, 0, 1, 1], [], []>} : vector<16x16xf32>, vector<16x32xf32>, vector<16x32xf32> -> vector<16x32xf32>
    %6 = vector.broadcast %4 : vector<1x32xf32> to vector<16x32xf32>
    %7 = arith.addf %5, %6 : vector<16x32xf32>
    %8 = math.tanh %7 : vector<16x32xf32>
    %9 = vector.shape_cast %8 : vector<16x32xf32> to vector<2x8x32xf32>
    %cst_4 = arith.constant dense<0.000000e+00> : vector<2x32xf32>
    %10 = vector.multi_reduction <add>, %9, %cst_4 [1] : vector<2x8x32xf32> to vector<2x32xf32>
    %cst_5 = arith.constant 1.250000e-01 : f32
    %11 = vector.broadcast %cst_5 : f32 to vector<2x32xf32>
    %12 = arith.mulf %10, %11 : vector<2x32xf32>
    %c0_6 = arith.constant 0 : index
    %c0_7 = arith.constant 0 : index
    %13 = vector.load %arg1[%c0_6, %c0_7] : memref<32x1xi32, #tpu.memory_space<vmem>>, vector<32x1xi32>
    %14 = tpu.iota {dimensions = array<i32: 1>} : vector<32x16xi32>
    %15 = vector.broadcast %13 : vector<32x1xi32> to vector<32x16xi32>
    %16 = arith.cmpi eq, %15, %14 : vector<32x16xi32>
    %cst_8 = arith.constant 1.000000e+00 : f32
    %cst_9 = arith.constant 0.000000e+00 : f32
    %17 = vector.broadcast %cst_8 : f32 to vector<32x16xf32>
    %18 = vector.broadcast %cst_9 : f32 to vector<32x16xf32>
    %19 = arith.select %16, %17, %18 : vector<32x16xi1>, vector<32x16xf32>
    %c0_10 = arith.constant 0 : index
    %c0_11 = arith.constant 0 : index
    %20 = vector.load %arg2[%c0_10, %c0_11] : memref<16x32xf32, #tpu.memory_space<vmem>>, vector<16x32xf32>
    %cst_12 = arith.constant dense<0.000000e+00> : vector<32x32xf32>
    %21 = tpu.matmul %19, %20, %cst_12 {dimension_numbers = #tpu.dot_dimension_numbers<[1], [0], [0], [1], [0, 0, 1, 1], [], []>} : vector<32x16xf32>, vector<16x32xf32>, vector<32x32xf32> -> vector<32x32xf32>
    %22 = tpu.iota {dimensions = array<i32: 0>} : vector<8x128xi32>
    %23 = tpu.iota {dimensions = array<i32: 1>} : vector<8x128xi32>
    %24 = arith.cmpi eq, %22, %23 : vector<8x128xi32>
    %cst_13 = arith.constant 1.000000e+00 : f32
    %cst_14 = arith.constant 0.000000e+00 : f32
    %25 = vector.broadcast %cst_13 : f32 to vector<8x128xf32>
    %26 = vector.broadcast %cst_14 : f32 to vector<8x128xf32>
    %27 = arith.select %24, %25, %26 : vector<8x128xi1>, vector<8x128xf32>
    %28 = vector.extract_strided_slice %21 {offsets = [0, 0], sizes = [16, 32], strides = [1, 1]} : vector<32x32xf32> to vector<16x32xf32>
    %c0_15 = arith.constant 0 : index
    %c0_16 = arith.constant 0 : index
    %c0_17 = arith.constant 0 : index
    %29 = vector.load %arg4[%c0_15, %c0_16, %c0_17] : memref<2x32x32xf32, #tpu.memory_space<vmem>>, vector<1x32x32xf32>
    %30 = vector.shape_cast %29 : vector<1x32x32xf32> to vector<32x32xf32>
    %c0_18 = arith.constant 0 : index
    %c0_19 = arith.constant 0 : index
    %c0_20 = arith.constant 0 : index
    %31 = vector.load %arg5[%c0_18, %c0_19, %c0_20] : memref<2x64x32xf32, #tpu.memory_space<vmem>>, vector<1x64x32xf32>
    %32 = vector.shape_cast %31 : vector<1x64x32xf32> to vector<64x32xf32>
    %c0_21 = arith.constant 0 : index
    %c0_22 = arith.constant 0 : index
    %c0_23 = arith.constant 0 : index
    %33 = vector.load %arg6[%c0_21, %c0_22, %c0_23] : memref<2x33x128xf32, #tpu.memory_space<vmem>>, vector<1x33x128xf32>
    %34 = vector.shape_cast %33 : vector<1x33x128xf32> to vector<33x128xf32>
    %35 = vector.extract_strided_slice %34 {offsets = [0, 0], sizes = [32, 128], strides = [1, 1]} : vector<33x128xf32> to vector<32x128xf32>
    %36 = vector.extract_strided_slice %34 {offsets = [32, 0], sizes = [1, 128], strides = [1, 1]} : vector<33x128xf32> to vector<1x128xf32>
    %cst_24 = arith.constant dense<0.000000e+00> : vector<16x32xf32>
    %37 = tpu.matmul %28, %30, %cst_24 {dimension_numbers = #tpu.dot_dimension_numbers<[1], [0], [0], [1], [0, 0, 1, 1], [], []>} : vector<16x32xf32>, vector<32x32xf32>, vector<16x32xf32> -> vector<16x32xf32>
    %38 = vector.shape_cast %37 : vector<16x32xf32> to vector<2x8x32xf32>
    %39 = vector.shape_cast %12 : vector<2x32xf32> to vector<2x1x32xf32>
    %40 = vector.broadcast %39 : vector<2x1x32xf32> to vector<2x8x32xf32>
    %41 = arith.addf %38, %40 : vector<2x8x32xf32>
    %42 = math.tanh %41 : vector<2x8x32xf32>
    "tpu.trace_start"() <{level = 10 : i32, message = "bqh,bkh->bqk"}> : () -> ()
    %cst_25 = arith.constant dense<0.000000e+00> : vector<2x8x8xf32>
    %43 = tpu.matmul %42, %9, %cst_25 {dimension_numbers = #tpu.dot_dimension_numbers<[2], [2], [1], [1], [0, 0, 0, 1, 1, 1], [0], [0]>} : vector<2x8x32xf32>, vector<2x8x32xf32>, vector<2x8x8xf32> -> vector<2x8x8xf32>
    "tpu.trace_stop"() : () -> ()
    %cst_26 = arith.constant dense<0xFF800000> : vector<2x8xf32>
    %44 = vector.multi_reduction <maximumf>, %43, %cst_26 [2] : vector<2x8x8xf32> to vector<2x8xf32>
    %45 = vector.shape_cast %44 : vector<2x8xf32> to vector<2x8x1xf32>
    %46 = vector.broadcast %45 : vector<2x8x1xf32> to vector<2x8x8xf32>
    %47 = arith.subf %43, %46 : vector<2x8x8xf32>
    %48 = math.exp %47 : vector<2x8x8xf32>
    %cst_27 = arith.constant dense<0.000000e+00> : vector<2x8xf32>
    %49 = vector.multi_reduction <add>, %48, %cst_27 [2] : vector<2x8x8xf32> to vector<2x8xf32>
    %50 = vector.shape_cast %49 : vector<2x8xf32> to vector<2x8x1xf32>
    %51 = vector.broadcast %50 : vector<2x8x1xf32> to vector<2x8x8xf32>
    %52 = arith.divf %48, %51 : vector<2x8x8xf32>
    "tpu.trace_start"() <{level = 10 : i32, message = "bqk,bkh->bqh"}> : () -> ()
    %cst_28 = arith.constant dense<0.000000e+00> : vector<2x8x32xf32>
    %53 = tpu.matmul %52, %9, %cst_28 {dimension_numbers = #tpu.dot_dimension_numbers<[2], [1], [1], [2], [0, 0, 0, 1, 1, 2], [0], [0]>} : vector<2x8x8xf32>, vector<2x8x32xf32>, vector<2x8x32xf32> -> vector<2x8x32xf32>
    "tpu.trace_stop"() : () -> ()
    %54 = vector.shape_cast %53 : vector<2x8x32xf32> to vector<16x32xf32>
    %55 = vector.shape_cast %42 : vector<2x8x32xf32> to vector<16x32xf32>
    %56 = tpu.concatenate %54, %55 in 1 : vector<16x32xf32>, vector<16x32xf32> -> vector<16x64xf32>
    %cst_29 = arith.constant dense<0.000000e+00> : vector<16x32xf32>
    %57 = tpu.matmul %56, %32, %cst_29 {dimension_numbers = #tpu.dot_dimension_numbers<[1], [0], [0], [1], [0, 0, 1, 1], [], []>} : vector<16x64xf32>, vector<64x32xf32>, vector<16x32xf32> -> vector<16x32xf32>
    %58 = math.tanh %57 : vector<16x32xf32>
    %cst_30 = arith.constant dense<0.000000e+00> : vector<16x128xf32>
    %59 = tpu.matmul %58, %35, %cst_30 {dimension_numbers = #tpu.dot_dimension_numbers<[1], [0], [0], [1], [0, 0, 1, 1], [], []>} : vector<16x32xf32>, vector<32x128xf32>, vector<16x128xf32> -> vector<16x128xf32>
    %60 = vector.broadcast %36 : vector<1x128xf32> to vector<16x128xf32>
    %61 = arith.addf %59, %60 : vector<16x128xf32>
    %62 = vector.shape_cast %61 : vector<16x128xf32> to vector<2x8x128xf32>
    %63 = vector.shape_cast %52 : vector<2x8x8xf32> to vector<16x8xf32>
    %cst_31 = arith.constant dense<0.000000e+00> : vector<16x128xf32>
    %64 = tpu.matmul %63, %27, %cst_31 {dimension_numbers = #tpu.dot_dimension_numbers<[1], [0], [0], [1], [0, 0, 1, 1], [], []>} : vector<16x8xf32>, vector<8x128xf32>, vector<16x128xf32> -> vector<16x128xf32>
    %65 = vector.shape_cast %64 : vector<16x128xf32> to vector<2x8x128xf32>
    %c0_32 = arith.constant 0 : index
    %c0_33 = arith.constant 0 : index
    %c0_34 = arith.constant 0 : index
    %66 = vector.load %arg7[%c0_32, %c0_33, %c0_34] : memref<2x8x128xf32, #tpu.memory_space<vmem>>, vector<2x8x128xf32>
    tpu.vector_store %arg7[%c0_32, %c0_33, %c0_34], %62 {strides = array<i32>} : memref<2x8x128xf32, #tpu.memory_space<vmem>>, vector<2x8x128xf32>,
    %c0_35 = arith.constant 0 : index
    %c0_36 = arith.constant 0 : index
    %c0_37 = arith.constant 0 : index
    %67 = vector.load %arg8[%c0_35, %c0_36, %c0_37] : memref<2x8x128xf32, #tpu.memory_space<vmem>>, vector<2x8x128xf32>
    tpu.vector_store %arg8[%c0_35, %c0_36, %c0_37], %65 {strides = array<i32>} : memref<2x8x128xf32, #tpu.memory_space<vmem>>, vector<2x8x128xf32>,
    %68 = vector.extract_strided_slice %21 {offsets = [16, 0], sizes = [16, 32], strides = [1, 1]} : vector<32x32xf32> to vector<16x32xf32>
    %c1 = arith.constant 1 : index
    %c0_38 = arith.constant 0 : index
    %c0_39 = arith.constant 0 : index
    %69 = vector.load %arg4[%c1, %c0_38, %c0_39] : memref<2x32x32xf32, #tpu.memory_space<vmem>>, vector<1x32x32xf32>
    %70 = vector.shape_cast %69 : vector<1x32x32xf32> to vector<32x32xf32>
    %c1_40 = arith.constant 1 : index
    %c0_41 = arith.constant 0 : index
    %c0_42 = arith.constant 0 : index
    %71 = vector.load %arg5[%c1_40, %c0_41, %c0_42] : memref<2x64x32xf32, #tpu.memory_space<vmem>>, vector<1x64x32xf32>
    %72 = vector.shape_cast %71 : vector<1x64x32xf32> to vector<64x32xf32>
    %c1_43 = arith.constant 1 : index
    %c0_44 = arith.constant 0 : index
    %c0_45 = arith.constant 0 : index
    %73 = vector.load %arg6[%c1_43, %c0_44, %c0_45] : memref<2x33x128xf32, #tpu.memory_space<vmem>>, vector<1x33x128xf32>
    %74 = vector.shape_cast %73 : vector<1x33x128xf32> to vector<33x128xf32>
    %75 = vector.extract_strided_slice %74 {offsets = [0, 0], sizes = [32, 128], strides = [1, 1]} : vector<33x128xf32> to vector<32x128xf32>
    %76 = vector.extract_strided_slice %74 {offsets = [32, 0], sizes = [1, 128], strides = [1, 1]} : vector<33x128xf32> to vector<1x128xf32>
    %cst_46 = arith.constant dense<0.000000e+00> : vector<16x32xf32>
    %77 = tpu.matmul %68, %70, %cst_46 {dimension_numbers = #tpu.dot_dimension_numbers<[1], [0], [0], [1], [0, 0, 1, 1], [], []>} : vector<16x32xf32>, vector<32x32xf32>, vector<16x32xf32> -> vector<16x32xf32>
    %78 = vector.shape_cast %77 : vector<16x32xf32> to vector<2x8x32xf32>
    %79 = vector.shape_cast %12 : vector<2x32xf32> to vector<2x1x32xf32>
    %80 = vector.broadcast %79 : vector<2x1x32xf32> to vector<2x8x32xf32>
    %81 = arith.addf %78, %80 : vector<2x8x32xf32>
    %82 = math.tanh %81 : vector<2x8x32xf32>
    "tpu.trace_start"() <{level = 10 : i32, message = "bqh,bkh->bqk"}> : () -> ()
    %cst_47 = arith.constant dense<0.000000e+00> : vector<2x8x8xf32>
    %83 = tpu.matmul %82, %9, %cst_47 {dimension_numbers = #tpu.dot_dimension_numbers<[2], [2], [1], [1], [0, 0, 0, 1, 1, 1], [0], [0]>} : vector<2x8x32xf32>, vector<2x8x32xf32>, vector<2x8x8xf32> -> vector<2x8x8xf32>
    "tpu.trace_stop"() : () -> ()
    %cst_48 = arith.constant dense<0xFF800000> : vector<2x8xf32>
    %84 = vector.multi_reduction <maximumf>, %83, %cst_48 [2] : vector<2x8x8xf32> to vector<2x8xf32>
    %85 = vector.shape_cast %84 : vector<2x8xf32> to vector<2x8x1xf32>
    %86 = vector.broadcast %85 : vector<2x8x1xf32> to vector<2x8x8xf32>
    %87 = arith.subf %83, %86 : vector<2x8x8xf32>
    %88 = math.exp %87 : vector<2x8x8xf32>
    %cst_49 = arith.constant dense<0.000000e+00> : vector<2x8xf32>
    %89 = vector.multi_reduction <add>, %88, %cst_49 [2] : vector<2x8x8xf32> to vector<2x8xf32>
    %90 = vector.shape_cast %89 : vector<2x8xf32> to vector<2x8x1xf32>
    %91 = vector.broadcast %90 : vector<2x8x1xf32> to vector<2x8x8xf32>
    %92 = arith.divf %88, %91 : vector<2x8x8xf32>
    "tpu.trace_start"() <{level = 10 : i32, message = "bqk,bkh->bqh"}> : () -> ()
    %cst_50 = arith.constant dense<0.000000e+00> : vector<2x8x32xf32>
    %93 = tpu.matmul %92, %9, %cst_50 {dimension_numbers = #tpu.dot_dimension_numbers<[2], [1], [1], [2], [0, 0, 0, 1, 1, 2], [0], [0]>} : vector<2x8x8xf32>, vector<2x8x32xf32>, vector<2x8x32xf32> -> vector<2x8x32xf32>
    "tpu.trace_stop"() : () -> ()
    %94 = vector.shape_cast %93 : vector<2x8x32xf32> to vector<16x32xf32>
    %95 = vector.shape_cast %82 : vector<2x8x32xf32> to vector<16x32xf32>
    %96 = tpu.concatenate %94, %95 in 1 : vector<16x32xf32>, vector<16x32xf32> -> vector<16x64xf32>
    %cst_51 = arith.constant dense<0.000000e+00> : vector<16x32xf32>
    %97 = tpu.matmul %96, %72, %cst_51 {dimension_numbers = #tpu.dot_dimension_numbers<[1], [0], [0], [1], [0, 0, 1, 1], [], []>} : vector<16x64xf32>, vector<64x32xf32>, vector<16x32xf32> -> vector<16x32xf32>
    %98 = math.tanh %97 : vector<16x32xf32>
    %cst_52 = arith.constant dense<0.000000e+00> : vector<16x128xf32>
    %99 = tpu.matmul %98, %75, %cst_52 {dimension_numbers = #tpu.dot_dimension_numbers<[1], [0], [0], [1], [0, 0, 1, 1], [], []>} : vector<16x32xf32>, vector<32x128xf32>, vector<16x128xf32> -> vector<16x128xf32>
    %100 = vector.broadcast %76 : vector<1x128xf32> to vector<16x128xf32>
    %101 = arith.addf %99, %100 : vector<16x128xf32>
    %102 = vector.shape_cast %101 : vector<16x128xf32> to vector<2x8x128xf32>
    %103 = vector.shape_cast %92 : vector<2x8x8xf32> to vector<16x8xf32>
    %cst_53 = arith.constant dense<0.000000e+00> : vector<16x128xf32>
    %104 = tpu.matmul %103, %27, %cst_53 {dimension_numbers = #tpu.dot_dimension_numbers<[1], [0], [0], [1], [0, 0, 1, 1], [], []>} : vector<16x8xf32>, vector<8x128xf32>, vector<16x128xf32> -> vector<16x128xf32>
    %105 = vector.shape_cast %104 : vector<16x128xf32> to vector<2x8x128xf32>
    %c0_54 = arith.constant 0 : index
    %c0_55 = arith.constant 0 : index
    %c0_56 = arith.constant 0 : index
    %106 = vector.load %arg9[%c0_54, %c0_55, %c0_56] : memref<2x8x128xf32, #tpu.memory_space<vmem>>, vector<2x8x128xf32>
    tpu.vector_store %arg9[%c0_54, %c0_55, %c0_56], %102 {strides = array<i32>} : memref<2x8x128xf32, #tpu.memory_space<vmem>>, vector<2x8x128xf32>,
    %c0_57 = arith.constant 0 : index
    %c0_58 = arith.constant 0 : index
    %c0_59 = arith.constant 0 : index
    %107 = vector.load %arg10[%c0_57, %c0_58, %c0_59] : memref<2x8x128xf32, #tpu.memory_space<vmem>>, vector<2x8x128xf32>
    tpu.vector_store %arg10[%c0_57, %c0_58, %c0_59], %105 {strides = array<i32>} : memref<2x8x128xf32, #tpu.memory_space<vmem>>, vector<2x8x128xf32>,
    return
  }
}

</mosaic_0001>

<llo_original>
// kernel: _forward_main.1
$region0: #{_forward_main.1}
  #allocation0 [shape = 'u32[]', space=smem, size = 0x4, offset = 0x4, fixed_abs, tag = 'smem constant byte address 0x4 - core index']
  #allocation1 [shape = 'u32[144,128]{1,0:T(1,128)}', space=vmem, size = 0x12000, scoped, tag = 'internal scratch']
  %s0 = inlined_call_operand.vmem [shape: f32[2,8,16], index: 0, kind: input, shape index: {}]
  %s1 = inlined_call_operand.vmem [shape: s32[32,1], index: 1, kind: input, shape index: {}]
  %s2 = inlined_call_operand.vmem [shape: f32[16,32], index: 2, kind: input, shape index: {}]
  %s3 = inlined_call_operand.vmem [shape: f32[17,32], index: 3, kind: input, shape index: {}]
  %s4 = inlined_call_operand.vmem [shape: f32[2,32,32], index: 4, kind: input, shape index: {}]
  %s5 = inlined_call_operand.vmem [shape: f32[2,64,32], index: 5, kind: input, shape index: {}]
  %s6 = inlined_call_operand.vmem [shape: f32[2,33,128], index: 6, kind: input, shape index: {}]
  %s7 = inlined_call_operand.vmem [shape: f32[2,8,128], index: 7, kind: output, shape index: {0}]
  %s8 = inlined_call_operand.vmem [shape: f32[2,8,128], index: 8, kind: output, shape index: {1}]
  %s9 = inlined_call_operand.vmem [shape: f32[2,8,128], index: 9, kind: output, shape index: {2}]
  %s10 = inlined_call_operand.vmem [shape: f32[2,8,128], index: 10, kind: output, shape index: {3}]
  %11 = xla_tuple %s7, %s8, %s9, %s10
  %s12 = sld [smem:[#allocation0]]
  $region62: #{_forward_main.1} parent=0
    _
  %s14 = ssub.s32 1, %s12
  %s15 = scalar_select 0, %s14, %s12
  // Predicated region
  $region2: #{_forward_main.1} parent=0 // pred_check
    _
  $region3: #{_forward_main.1} parent=0 // pred_check_branch
    %17 = sbr.rel (0) target = $region5
  $region4: #{_forward_main.1} parent=0 // pred_region
    _
  $region5: #{_forward_main.1} parent=0 // pred_fallthru
    _
  // Predicated region
  $region6: #{_forward_main.1} parent=0 // pred_check
    _
  $region7: #{_forward_main.1} parent=0 // pred_check_branch
    %19 = sbr.rel (0) target = $region9
  $region8: #{_forward_main.1} parent=0 // pred_region
    _
  $region9: #{_forward_main.1} parent=0 // pred_fallthru
    _
  // Predicated region
  $region10: #{_forward_main.1} parent=0 // pred_check
    _
  $region11: #{_forward_main.1} parent=0 // pred_check_branch
    %21 = sbr.rel (0) target = $region13
  $region12: #{_forward_main.1} parent=0 // pred_region
    _
  $region13: #{_forward_main.1} parent=0 // pred_fallthru
    _
  // Predicated region
  $region14: #{_forward_main.1} parent=0 // pred_check
    _
  $region15: #{_forward_main.1} parent=0 // pred_check_branch
    %23 = sbr.rel (0) target = $region17
  $region16: #{_forward_main.1} parent=0 // pred_region
    _
  $region17: #{_forward_main.1} parent=0 // pred_fallthru
    _
  // Predicated region
  $region18: #{_forward_main.1} parent=0 // pred_check
    _
  $region19: #{_forward_main.1} parent=0 // pred_check_branch
    %25 = sbr.rel (0) target = $region21
  $region20: #{_forward_main.1} parent=0 // pred_region
    _
  $region21: #{_forward_main.1} parent=0 // pred_fallthru
    _
  // Predicated region
  $region22: #{_forward_main.1} parent=0 // pred_check
    _
  $region23: #{_forward_main.1} parent=0 // pred_check_branch
    %27 = sbr.rel (0) target = $region25
  $region24: #{_forward_main.1} parent=0 // pred_region
    _
  $region25: #{_forward_main.1} parent=0 // pred_fallthru
    _
  // Predicated region
  $region26: #{_forward_main.1} parent=0 // pred_check
    _
  $region27: #{_forward_main.1} parent=0 // pred_check_branch
    %29 = sbr.rel (0) target = $region29
  $region28: #{_forward_main.1} parent=0 // pred_region
    _
  $region29: #{_forward_main.1} parent=0 // pred_fallthru
    _
  %v30 = vld [vmem:[%s0] sm:$0xff]
  %v31 = vld [vmem:[%s0 + $0x8] sm:$0xff]
  %v32 = vld [vmem:[%s3] sm:$0xff]
  %v33 = vld [vmem:[%s3 + $0x8] sm:$0xff]
  %v34 = vld [vmem:[%s3 + $0x10] sm:$0x1]
  %v35 = vlaneseq
  %v36 = vshrl.u32 %v35, 7
  %v37 = vsub.s32 0, %v36
  %v38 = vrot.slane %v34, %v37
  %vm39 = vcmask 130048
  %v41 = vsel %vm39, %v30, 0
  %v44 = vsel %vm39, %v31, 0
  %46 = vmatprep.subr.mxu0 0.0
  %47 = vmatpush1.msra.mxu0 0.0
  %48 = vmatprep.subr.mxu0 0.0
  %49 = vmatpush1.msra.mxu0 0.0
  %50 = vmatprep.subr.mxu0 0.0
  %51 = vmatpush1.msra.mxu0 0.0
  %52 = vmatprep.subr.mxu0 0.0
  %53 = vmatpush1.msra.mxu0 0.0
  %54 = vmatprep.subr.mxu0 0.0
  %55 = vmatpush1.msra.mxu0 0.0
  %56 = vmatprep.subr.mxu0 0.0
  %57 = vmatpush1.msra.mxu0 0.0
  %58 = vmatprep.subr.mxu0 0.0
  %59 = vmatpush1.msra.mxu0 0.0
  %60 = vmatprep.subr.mxu0 0.0
  %61 = vmatpush1.msra.mxu0 0.0
  %62 = vmatprep.subr.mxu0 0.0
  %63 = vmatpush1.msra.mxu0 0.0
  %64 = vmatprep.subr.mxu0 0.0
  %65 = vmatpush1.msra.mxu0 0.0
  %66 = vmatprep.subr.mxu0 0.0
  %67 = vmatpush1.msra.mxu0 0.0
  %68 = vmatprep.subr.mxu0 0.0
  %69 = vmatpush1.msra.mxu0 0.0
  %70 = vmatprep.subr.mxu0 0.0
  %71 = vmatpush1.msra.mxu0 0.0
  %72 = vmatprep.subr.mxu0 0.0
  %73 = vmatpush1.msra.mxu0 0.0
  %74 = vmatprep.subr.mxu0 0.0
  %75 = vmatpush1.msra.mxu0 %v33
  %76 = vmatprep.subr.mxu0 0.0
  %77 = vmatpush1.msra.mxu0 %v32
  %78 = vmatprep.subr.mxu0 0.0
  %79 = vmatpush2.msra.mxu0 0.0
  %80 = vmatprep.subr.mxu0 0.0
  %81 = vmatpush2.msra.mxu0 0.0
  %82 = vmatprep.subr.mxu0 0.0
  %83 = vmatpush2.msra.mxu0 0.0
  %84 = vmatprep.subr.mxu0 0.0
  %85 = vmatpush2.msra.mxu0 0.0
  %86 = vmatprep.subr.mxu0 0.0
  %87 = vmatpush2.msra.mxu0 0.0
  %88 = vmatprep.subr.mxu0 0.0
  %89 = vmatpush2.msra.mxu0 0.0
  %90 = vmatprep.subr.mxu0 0.0
  %91 = vmatpush2.msra.mxu0 0.0
  %92 = vmatprep.subr.mxu0 0.0
  %93 = vmatpush2.msra.mxu0 0.0
  %94 = vmatprep.subr.mxu0 0.0
  %95 = vmatpush2.msra.mxu0 0.0
  %96 = vmatprep.subr.mxu0 0.0
  %97 = vmatpush2.msra.mxu0 0.0
  %98 = vmatprep.subr.mxu0 0.0
  %99 = vmatpush2.msra.mxu0 0.0
  %100 = vmatprep.subr.mxu0 0.0
  %101 = vmatpush2.msra.mxu0 0.0
  %102 = vmatprep.subr.mxu0 0.0
  %103 = vmatpush2.msra.mxu0 0.0
  %104 = vmatprep.subr.mxu0 0.0
  %105 = vmatpush2.msra.mxu0 0.0
  %106 = vmatprep.subr.mxu0 0.0
  %107 = vmatpush2.msra.mxu0 0.0
  %108 = vmatprep.subr.mxu0 0.0
  %109 = vmatpush2.msra.mxu0 0.0
  %110 = vmatprep.mubr.f32.mxu0 0.0
  %111 = vmatmul.mubr.f32.gmra.mxu0 %v41
  %v112 = vpop.f32.mrf.mxu0
  %v113 = vadd.f32 %v38, %v112
  %v114 = vpop.f32.mrf.mxu0
  %115 = vmatprep.mubr.f32.mxu0 0.0
  %116 = vmatmul.mubr.f32.gmra.mxu0 %v44
  %v117 = vpop.f32.mrf.mxu0
  %v118 = vadd.f32 %v38, %v117
  %v119 = vpop.f32.mrf.mxu0
  %120 = vdwg.mxu0
  %v121 = vtanh.pop %v113
  %v122 = vtanh.pop %v118
  %vm123 = vcmask 261120
  %v124 = vsel %vm123, %v121, 0.0
  %v125 = vrot.slane %v124, 4
  %v126 = vadd.f32 %v124, %v125
  %v127 = vrot.slane %v126, 2
  %v128 = vadd.f32 %v126, %v127
  %v129 = vrot.slane %v128, 1
  %v130 = vadd.f32 %v128, %v129
  %v131 = vsel %vm123, %v122, 0.0
  %v132 = vrot.slane %v131, 4
  %v133 = vadd.f32 %v131, %v132
  %v134 = vrot.slane %v133, 2
  %v135 = vadd.f32 %v133, %v134
  %v136 = vrot.slane %v135, 1
  %v137 = vadd.f32 %v135, %v136
  %v138 = vmul.f32 %v130, 0.125
  %v139 = vmul.f32 %v137, 0.125
  %v140 = vld [vmem:[%s1] sm:$0xff]
  %v141 = vld [vmem:[%s1 + $0x8] sm:$0xff]
  %v142 = vld [vmem:[%s1 + $0x10] sm:$0xff]
  %v143 = vld [vmem:[%s1 + $0x18] sm:$0xff]
  %v144 = vlaneseq
  %v145 = vand.u32 %v144, 127
  %146 = vset.pattern.permute.xlu0 0
  %147 = vperm.xlu0 %146, %v140
  %v148 = vpop.permute.xlu0 %147
  %149 = vset.pattern.permute.xlu0 0
  %150 = vperm.xlu0 %149, %v141
  %v151 = vpop.permute.xlu0 %150
  %152 = vset.pattern.permute.xlu0 0
  %153 = vperm.xlu0 %152, %v142
  %v154 = vpop.permute.xlu0 %153
  %155 = vset.pattern.permute.xlu0 0
  %156 = vperm.xlu0 %155, %v143
  %v157 = vpop.permute.xlu0 %156
  %vm158 = vcmp.eq.s32.totalorder %v148, %v145
  %vm159 = vcmp.eq.s32.totalorder %v151, %v145
  %vm160 = vcmp.eq.s32.totalorder %v154, %v145
  %vm161 = vcmp.eq.s32.totalorder %v157, %v145
  %v162 = vsel %vm158, 1.0, 0.0
  %v163 = vsel %vm159, 1.0, 0.0
  %v164 = vsel %vm160, 1.0, 0.0
  %v165 = vsel %vm161, 1.0, 0.0
  %v166 = vld [vmem:[%s2] sm:$0xff]
  %v167 = vld [vmem:[%s2 + $0x8] sm:$0xff]
  %v169 = vsel %vm39, %v162, 0
  %v172 = vsel %vm39, %v163, 0
  %v175 = vsel %vm39, %v164, 0
  %v178 = vsel %vm39, %v165, 0
  %180 = vmatprep.subr.mxu0 0.0
  %181 = vmatpush1.msra.mxu0 0.0
  %182 = vmatprep.subr.mxu0 0.0
  %183 = vmatpush1.msra.mxu0 0.0
  %184 = vmatprep.subr.mxu0 0.0
  %185 = vmatpush1.msra.mxu0 0.0
  %186 = vmatprep.subr.mxu0 0.0
  %187 = vmatpush1.msra.mxu0 0.0
  %188 = vmatprep.subr.mxu0 0.0
  %189 = vmatpush1.msra.mxu0 0.0
  %190 = vmatprep.subr.mxu0 0.0
  %191 = vmatpush1.msra.mxu0 0.0
  %192 = vmatprep.subr.mxu0 0.0
  %193 = vmatpush1.msra.mxu0 0.0
  %194 = vmatprep.subr.mxu0 0.0
  %195 = vmatpush1.msra.mxu0 0.0
  %196 = vmatprep.subr.mxu0 0.0
  %197 = vmatpush1.msra.mxu0 0.0
  %198 = vmatprep.subr.mxu0 0.0
  %199 = vmatpush1.msra.mxu0 0.0
  %200 = vmatprep.subr.mxu0 0.0
  %201 = vmatpush1.msra.mxu0 0.0
  %202 = vmatprep.subr.mxu0 0.0
  %203 = vmatpush1.msra.mxu0 0.0
  %204 = vmatprep.subr.mxu0 0.0
  %205 = vmatpush1.msra.mxu0 0.0
  %206 = vmatprep.subr.mxu0 0.0
  %207 = vmatpush1.msra.mxu0 0.0
  %208 = vmatprep.subr.mxu0 0.0
  %209 = vmatpush1.msra.mxu0 %v167
  %210 = vmatprep.subr.mxu0 0.0
  %211 = vmatpush1.msra.mxu0 %v166
  %212 = vmatprep.subr.mxu0 0.0
  %213 = vmatpush2.msra.mxu0 0.0
  %214 = vmatprep.subr.mxu0 0.0
  %215 = vmatpush2.msra.mxu0 0.0
  %216 = vmatprep.subr.mxu0 0.0
  %217 = vmatpush2.msra.mxu0 0.0
  %218 = vmatprep.subr.mxu0 0.0
  %219 = vmatpush2.msra.mxu0 0.0
  %220 = vmatprep.subr.mxu0 0.0
  %221 = vmatpush2.msra.mxu0 0.0
  %222 = vmatprep.subr.mxu0 0.0
  %223 = vmatpush2.msra.mxu0 0.0
  %224 = vmatprep.subr.mxu0 0.0
  %225 = vmatpush2.msra.mxu0 0.0
  %226 = vmatprep.subr.mxu0 0.0
  %227 = vmatpush2.msra.mxu0 0.0
  %228 = vmatprep.subr.mxu0 0.0
  %229 = vmatpush2.msra.mxu0 0.0
  %230 = vmatprep.subr.mxu0 0.0
  %231 = vmatpush2.msra.mxu0 0.0
  %232 = vmatprep.subr.mxu0 0.0
  %233 = vmatpush2.msra.mxu0 0.0
  %234 = vmatprep.subr.mxu0 0.0
  %235 = vmatpush2.msra.mxu0 0.0
  %236 = vmatprep.subr.mxu0 0.0
  %237 = vmatpush2.msra.mxu0 0.0
  %238 = vmatprep.subr.mxu0 0.0
  %239 = vmatpush2.msra.mxu0 0.0
  %240 = vmatprep.subr.mxu0 0.0
  %241 = vmatpush2.msra.mxu0 0.0
  %242 = vmatprep.subr.mxu0 0.0
  %243 = vmatpush2.msra.mxu0 0.0
  %244 = vmatprep.mubr.f32.mxu0 0.0
  %245 = vmatmul.mubr.f32.gmra.mxu0 %v169
  %v246 = vpop.f32.mrf.mxu0
  %v247 = vadd.f32 0.0, %v246
  %v248 = vpop.f32.mrf.mxu0
  %249 = vmatprep.mubr.f32.mxu0 0.0
  %250 = vmatmul.mubr.f32.gmra.mxu0 %v172
  %v251 = vpop.f32.mrf.mxu0
  %v252 = vadd.f32 0.0, %v251
  %v253 = vpop.f32.mrf.mxu0
  %254 = vmatprep.mubr.f32.mxu0 0.0
  %255 = vmatmul.mubr.f32.gmra.mxu0 %v175
  %v256 = vpop.f32.mrf.mxu0
  %v257 = vadd.f32 0.0, %v256
  %v258 = vpop.f32.mrf.mxu0
  %259 = vmatprep.mubr.f32.mxu0 0.0
  %260 = vmatmul.mubr.f32.gmra.mxu0 %v178
  %v261 = vpop.f32.mrf.mxu0
  %v262 = vadd.f32 0.0, %v261
  %v263 = vpop.f32.mrf.mxu0
  %264 = vdwg.mxu0
  %v265 = vlaneseq
  %v266 = vshrl.u32 %v265, 7
  %vm267 = vcmp.eq.s32.totalorder %v266, %v145
  %v268 = vsel %vm267, 1.0, 0.0
  %v269 = vld [vmem:[%s4] sm:$0xff]
  %v270 = vld [vmem:[%s4 + $0x8] sm:$0xff]
  %v271 = vld [vmem:[%s4 + $0x10] sm:$0xff]
  %v272 = vld [vmem:[%s4 + $0x18] sm:$0xff]
  %v273 = vld [vmem:[%s5] sm:$0xff]
  %v274 = vld [vmem:[%s5 + $0x8] sm:$0xff]
  %v275 = vld [vmem:[%s5 + $0x10] sm:$0xff]
  %v276 = vld [vmem:[%s5 + $0x18] sm:$0xff]
  %v277 = vld [vmem:[%s5 + $0x20] sm:$0xff]
  %v278 = vld [vmem:[%s5 + $0x28] sm:$0xff]
  %v279 = vld [vmem:[%s5 + $0x30] sm:$0xff]
  %v280 = vld [vmem:[%s5 + $0x38] sm:$0xff]
  %v281 = vld [vmem:[%s6] sm:$0xff]
  %v282 = vld [vmem:[%s6 + $0x8] sm:$0xff]
  %v283 = vld [vmem:[%s6 + $0x10] sm:$0xff]
  %v284 = vld [vmem:[%s6 + $0x18] sm:$0xff]
  %v285 = vld [vmem:[%s6 + $0x20] sm:$0x1]
  %v287 = vsel %vm123, %v247, 0
  %v290 = vsel %vm123, %v252, 0
  %292 = vmatprep.subr.mxu0 0.0
  %293 = vmatpush1.msra.mxu0 0.0
  %294 = vmatprep.subr.mxu0 0.0
  %295 = vmatpush1.msra.mxu0 0.0
  %296 = vmatprep.subr.mxu0 0.0
  %297 = vmatpush1.msra.mxu0 0.0
  %298 = vmatprep.subr.mxu0 0.0
  %299 = vmatpush1.msra.mxu0 0.0
  %300 = vmatprep.subr.mxu0 0.0
  %301 = vmatpush1.msra.mxu0 0.0
  %302 = vmatprep.subr.mxu0 0.0
  %303 = vmatpush1.msra.mxu0 0.0
  %304 = vmatprep.subr.mxu0 0.0
  %305 = vmatpush1.msra.mxu0 0.0
  %306 = vmatprep.subr.mxu0 0.0
  %307 = vmatpush1.msra.mxu0 0.0
  %308 = vmatprep.subr.mxu0 0.0
  %309 = vmatpush1.msra.mxu0 0.0
  %310 = vmatprep.subr.mxu0 0.0
  %311 = vmatpush1.msra.mxu0 0.0
  %312 = vmatprep.subr.mxu0 0.0
  %313 = vmatpush1.msra.mxu0 0.0
  %314 = vmatprep.subr.mxu0 0.0
  %315 = vmatpush1.msra.mxu0 0.0
  %316 = vmatprep.subr.mxu0 0.0
  %317 = vmatpush1.msra.mxu0 %v272
  %318 = vmatprep.subr.mxu0 0.0
  %319 = vmatpush1.msra.mxu0 %v271
  %320 = vmatprep.subr.mxu0 0.0
  %321 = vmatpush1.msra.mxu0 %v270
  %322 = vmatprep.subr.mxu0 0.0
  %323 = vmatpush1.msra.mxu0 %v269
  %324 = vmatprep.subr.mxu0 0.0
  %325 = vmatpush2.msra.mxu0 0.0
  %326 = vmatprep.subr.mxu0 0.0
  %327 = vmatpush2.msra.mxu0 0.0
  %328 = vmatprep.subr.mxu0 0.0
  %329 = vmatpush2.msra.mxu0 0.0
  %330 = vmatprep.subr.mxu0 0.0
  %331 = vmatpush2.msra.mxu0 0.0
  %332 = vmatprep.subr.mxu0 0.0
  %333 = vmatpush2.msra.mxu0 0.0
  %334 = vmatprep.subr.mxu0 0.0
  %335 = vmatpush2.msra.mxu0 0.0
  %336 = vmatprep.subr.mxu0 0.0
  %337 = vmatpush2.msra.mxu0 0.0
  %338 = vmatprep.subr.mxu0 0.0
  %339 = vmatpush2.msra.mxu0 0.0
  %340 = vmatprep.subr.mxu0 0.0
  %341 = vmatpush2.msra.mxu0 0.0
  %342 = vmatprep.subr.mxu0 0.0
  %343 = vmatpush2.msra.mxu0 0.0
  %344 = vmatprep.subr.mxu0 0.0
  %345 = vmatpush2.msra.mxu0 0.0
  %346 = vmatprep.subr.mxu0 0.0
  %347 = vmatpush2.msra.mxu0 0.0
  %348 = vmatprep.subr.mxu0 0.0
  %349 = vmatpush2.msra.mxu0 0.0
  %350 = vmatprep.subr.mxu0 0.0
  %351 = vmatpush2.msra.mxu0 0.0
  %352 = vmatprep.subr.mxu0 0.0
  %353 = vmatpush2.msra.mxu0 0.0
  %354 = vmatprep.subr.mxu0 0.0
  %355 = vmatpush2.msra.mxu0 0.0
  %356 = vmatprep.mubr.f32.mxu0 0.0
  %357 = vmatmul.mubr.f32.gmra.mxu0 %v287
  %v358 = vpop.f32.mrf.mxu0
  %v359 = vadd.f32 0.0, %v358
  %v360 = vpop.f32.mrf.mxu0
  %361 = vmatprep.mubr.f32.mxu0 0.0
  %362 = vmatmul.mubr.f32.gmra.mxu0 %v290
  %v363 = vpop.f32.mrf.mxu0
  %v364 = vadd.f32 0.0, %v363
  %v365 = vpop.f32.mrf.mxu0
  %366 = vdwg.mxu0
  %v367 = vadd.f32 %v359, %v138
  %v368 = vadd.f32 %v364, %v139
  %v369 = vtanh.pop %v367
  %v370 = vtanh.pop %v368
  %v372 = vsel %vm123, %v369, 0
  %v375 = vsel %vm123, %v121, 0
  %377 = vmatprep.subr.mxu0 0.0
  %378 = vmatpush1.xpose.msra.mxu0 0.0
  %379 = vmatprep.subr.mxu0 0.0
  %380 = vmatpush1.xpose.msra.mxu0 0.0
  %381 = vmatprep.subr.mxu0 0.0
  %382 = vmatpush1.xpose.msra.mxu0 0.0
  %383 = vmatprep.subr.mxu0 0.0
  %384 = vmatpush1.xpose.msra.mxu0 0.0
  %385 = vmatprep.subr.mxu0 0.0
  %386 = vmatpush1.xpose.msra.mxu0 0.0
  %387 = vmatprep.subr.mxu0 0.0
  %388 = vmatpush1.xpose.msra.mxu0 0.0
  %389 = vmatprep.subr.mxu0 0.0
  %390 = vmatpush1.xpose.msra.mxu0 0.0
  %391 = vmatprep.subr.mxu0 0.0
  %392 = vmatpush1.xpose.msra.mxu0 0.0
  %393 = vmatprep.subr.mxu0 0.0
  %394 = vmatpush1.xpose.msra.mxu0 0.0
  %395 = vmatprep.subr.mxu0 0.0
  %396 = vmatpush1.xpose.msra.mxu0 0.0
  %397 = vmatprep.subr.mxu0 0.0
  %398 = vmatpush1.xpose.msra.mxu0 0.0
  %399 = vmatprep.subr.mxu0 0.0
  %400 = vmatpush1.xpose.msra.mxu0 0.0
  %401 = vmatprep.subr.mxu0 0.0
  %402 = vmatpush1.xpose.msra.mxu0 0.0
  %403 = vmatprep.subr.mxu0 0.0
  %404 = vmatpush1.xpose.msra.mxu0 0.0
  %405 = vmatprep.subr.mxu0 0.0
  %406 = vmatpush1.xpose.msra.mxu0 0.0
  %407 = vmatprep.subr.mxu0 0.0
  %408 = vmatpush1.xpose.msra.mxu0 %v375
  %409 = vmatprep.subr.mxu0 0.0
  %410 = vmatpush2.xpose.msra.mxu0 0.0
  %411 = vmatprep.subr.mxu0 0.0
  %412 = vmatpush2.xpose.msra.mxu0 0.0
  %413 = vmatprep.subr.mxu0 0.0
  %414 = vmatpush2.xpose.msra.mxu0 0.0
  %415 = vmatprep.subr.mxu0 0.0
  %416 = vmatpush2.xpose.msra.mxu0 0.0
  %417 = vmatprep.subr.mxu0 0.0
  %418 = vmatpush2.xpose.msra.mxu0 0.0
  %419 = vmatprep.subr.mxu0 0.0
  %420 = vmatpush2.xpose.msra.mxu0 0.0
  %421 = vmatprep.subr.mxu0 0.0
  %422 = vmatpush2.xpose.msra.mxu0 0.0
  %423 = vmatprep.subr.mxu0 0.0
  %424 = vmatpush2.xpose.msra.mxu0 0.0
  %425 = vmatprep.subr.mxu0 0.0
  %426 = vmatpush2.xpose.msra.mxu0 0.0
  %427 = vmatprep.subr.mxu0 0.0
  %428 = vmatpush2.xpose.msra.mxu0 0.0
  %429 = vmatprep.subr.mxu0 0.0
  %430 = vmatpush2.xpose.msra.mxu0 0.0
  %431 = vmatprep.subr.mxu0 0.0
  %432 = vmatpush2.xpose.msra.mxu0 0.0
  %433 = vmatprep.subr.mxu0 0.0
  %434 = vmatpush2.xpose.msra.mxu0 0.0
  %435 = vmatprep.subr.mxu0 0.0
  %436 = vmatpush2.xpose.msra.mxu0 0.0
  %437 = vmatprep.subr.mxu0 0.0
  %438 = vmatpush2.xpose.msra.mxu0 0.0
  %439 = vmatprep.subr.mxu0 0.0
  %440 = vmatpush2.xpose.msra.mxu0 0.0
  %441 = vmatprep.mubr.f32.mxu0 0.0
  %442 = vmatmul.mubr.f32.gmra.mxu0 %v372
  %v443 = vpop.f32.mrf.mxu0
  %v444 = vadd.f32 0.0, %v443
  %v445 = vpop.f32.mrf.mxu0
  %446 = vdwg.mxu0
  %v448 = vsel %vm123, %v370, 0
  %v451 = vsel %vm123, %v122, 0
  %453 = vmatprep.subr.mxu0 0.0
  %454 = vmatpush1.xpose.msra.mxu0 0.0
  %455 = vmatprep.subr.mxu0 0.0
  %456 = vmatpush1.xpose.msra.mxu0 0.0
  %457 = vmatprep.subr.mxu0 0.0
  %458 = vmatpush1.xpose.msra.mxu0 0.0
  %459 = vmatprep.subr.mxu0 0.0
  %460 = vmatpush1.xpose.msra.mxu0 0.0
  %461 = vmatprep.subr.mxu0 0.0
  %462 = vmatpush1.xpose.msra.mxu0 0.0
  %463 = vmatprep.subr.mxu0 0.0
  %464 = vmatpush1.xpose.msra.mxu0 0.0
  %465 = vmatprep.subr.mxu0 0.0
  %466 = vmatpush1.xpose.msra.mxu0 0.0
  %467 = vmatprep.subr.mxu0 0.0
  %468 = vmatpush1.xpose.msra.mxu0 0.0
  %469 = vmatprep.subr.mxu0 0.0
  %470 = vmatpush1.xpose.msra.mxu0 0.0
  %471 = vmatprep.subr.mxu0 0.0
  %472 = vmatpush1.xpose.msra.mxu0 0.0
  %473 = vmatprep.subr.mxu0 0.0
  %474 = vmatpush1.xpose.msra.mxu0 0.0
  %475 = vmatprep.subr.mxu0 0.0
  %476 = vmatpush1.xpose.msra.mxu0 0.0
  %477 = vmatprep.subr.mxu0 0.0
  %478 = vmatpush1.xpose.msra.mxu0 0.0
  %479 = vmatprep.subr.mxu0 0.0
  %480 = vmatpush1.xpose.msra.mxu0 0.0
  %481 = vmatprep.subr.mxu0 0.0
  %482 = vmatpush1.xpose.msra.mxu0 0.0
  %483 = vmatprep.subr.mxu0 0.0
  %484 = vmatpush1.xpose.msra.mxu0 %v451
  %485 = vmatprep.subr.mxu0 0.0
  %486 = vmatpush2.xpose.msra.mxu0 0.0
  %487 = vmatprep.subr.mxu0 0.0
  %488 = vmatpush2.xpose.msra.mxu0 0.0
  %489 = vmatprep.subr.mxu0 0.0
  %490 = vmatpush2.xpose.msra.mxu0 0.0
  %491 = vmatprep.subr.mxu0 0.0
  %492 = vmatpush2.xpose.msra.mxu0 0.0
  %493 = vmatprep.subr.mxu0 0.0
  %494 = vmatpush2.xpose.msra.mxu0 0.0
  %495 = vmatprep.subr.mxu0 0.0
  %496 = vmatpush2.xpose.msra.mxu0 0.0
  %497 = vmatprep.subr.mxu0 0.0
  %498 = vmatpush2.xpose.msra.mxu0 0.0
  %499 = vmatprep.subr.mxu0 0.0
  %500 = vmatpush2.xpose.msra.mxu0 0.0
  %501 = vmatprep.subr.mxu0 0.0
  %502 = vmatpush2.xpose.msra.mxu0 0.0
  %503 = vmatprep.subr.mxu0 0.0
  %504 = vmatpush2.xpose.msra.mxu0 0.0
  %505 = vmatprep.subr.mxu0 0.0
  %506 = vmatpush2.xpose.msra.mxu0 0.0
  %507 = vmatprep.subr.mxu0 0.0
  %508 = vmatpush2.xpose.msra.mxu0 0.0
  %509 = vmatprep.subr.mxu0 0.0
  %510 = vmatpush2.xpose.msra.mxu0 0.0
  %511 = vmatprep.subr.mxu0 0.0
  %512 = vmatpush2.xpose.msra.mxu0 0.0
  %513 = vmatprep.subr.mxu0 0.0
  %514 = vmatpush2.xpose.msra.mxu0 0.0
  %515 = vmatprep.subr.mxu0 0.0
  %516 = vmatpush2.xpose.msra.mxu0 0.0
  %517 = vmatprep.mubr.f32.mxu0 0.0
  %518 = vmatmul.mubr.f32.gmra.mxu0 %v448
  %v519 = vpop.f32.mrf.mxu0
  %v520 = vadd.f32 0.0, %v519
  %v521 = vpop.f32.mrf.mxu0
  %522 = vdwg.mxu0
  %vm523 = vcmask 64512
  %v524 = vsel %vm523, %v444, -inf
  %525 = vmax.xlane.f32.xlu0 %v524
  %v526 = vpop.xlane.xlu0 %525
  %v527 = vsel %vm523, %v520, -inf
  %528 = vmax.xlane.f32.xlu0 %v527
  %v529 = vpop.xlane.xlu0 %528
  %v530 = vsub.f32 %v444, %v526
  %v531 = vsub.f32 %v520, %v529
  %v532 = vmul.f32 %v530, 1.442695
  %v533 = vpow.pop %v532
  %v534 = vmul.f32 %v531, 1.442695
  %v535 = vpow.pop %v534
  %v536 = vsel %vm523, %v533, 0.0
  %537 = vadd.xlane.f32.xlu0 %v536
  %v538 = vpop.xlane.xlu0 %537
  %v539 = vsel %vm523, %v535, 0.0
  %540 = vadd.xlane.f32.xlu0 %v539
  %v541 = vpop.xlane.xlu0 %540
  %v542 = vrcp.pop %v538
  %v543 = vmul.f32 %v533, %v542
  %v544 = vrcp.pop %v541
  %v545 = vmul.f32 %v535, %v544
  %v547 = vsel %vm523, %v543, 0
  %549 = vmatprep.subr.mxu0 0.0
  %550 = vmatpush1.msra.mxu0 0.0
  %551 = vmatprep.subr.mxu0 0.0
  %552 = vmatpush1.msra.mxu0 0.0
  %553 = vmatprep.subr.mxu0 0.0
  %554 = vmatpush1.msra.mxu0 0.0
  %555 = vmatprep.subr.mxu0 0.0
  %556 = vmatpush1.msra.mxu0 0.0
  %557 = vmatprep.subr.mxu0 0.0
  %558 = vmatpush1.msra.mxu0 0.0
  %559 = vmatprep.subr.mxu0 0.0
  %560 = vmatpush1.msra.mxu0 0.0
  %561 = vmatprep.subr.mxu0 0.0
  %562 = vmatpush1.msra.mxu0 0.0
  %563 = vmatprep.subr.mxu0 0.0
  %564 = vmatpush1.msra.mxu0 0.0
  %565 = vmatprep.subr.mxu0 0.0
  %566 = vmatpush1.msra.mxu0 0.0
  %567 = vmatprep.subr.mxu0 0.0
  %568 = vmatpush1.msra.mxu0 0.0
  %569 = vmatprep.subr.mxu0 0.0
  %570 = vmatpush1.msra.mxu0 0.0
  %571 = vmatprep.subr.mxu0 0.0
  %572 = vmatpush1.msra.mxu0 0.0
  %573 = vmatprep.subr.mxu0 0.0
  %574 = vmatpush1.msra.mxu0 0.0
  %575 = vmatprep.subr.mxu0 0.0
  %576 = vmatpush1.msra.mxu0 0.0
  %577 = vmatprep.subr.mxu0 0.0
  %578 = vmatpush1.msra.mxu0 0.0
  %579 = vmatprep.subr.mxu0 0.0
  %580 = vmatpush1.msra.mxu0 %v121
  %581 = vmatprep.subr.mxu0 0.0
  %582 = vmatpush2.msra.mxu0 0.0
  %583 = vmatprep.subr.mxu0 0.0
  %584 = vmatpush2.msra.mxu0 0.0
  %585 = vmatprep.subr.mxu0 0.0
  %586 = vmatpush2.msra.mxu0 0.0
  %587 = vmatprep.subr.mxu0 0.0
  %588 = vmatpush2.msra.mxu0 0.0
  %589 = vmatprep.subr.mxu0 0.0
  %590 = vmatpush2.msra.mxu0 0.0
  %591 = vmatprep.subr.mxu0 0.0
  %592 = vmatpush2.msra.mxu0 0.0
  %593 = vmatprep.subr.mxu0 0.0
  %594 = vmatpush2.msra.mxu0 0.0
  %595 = vmatprep.subr.mxu0 0.0
  %596 = vmatpush2.msra.mxu0 0.0
  %597 = vmatprep.subr.mxu0 0.0
  %598 = vmatpush2.msra.mxu0 0.0
  %599 = vmatprep.subr.mxu0 0.0
  %600 = vmatpush2.msra.mxu0 0.0
  %601 = vmatprep.subr.mxu0 0.0
  %602 = vmatpush2.msra.mxu0 0.0
  %603 = vmatprep.subr.mxu0 0.0
  %604 = vmatpush2.msra.mxu0 0.0
  %605 = vmatprep.subr.mxu0 0.0
  %606 = vmatpush2.msra.mxu0 0.0
  %607 = vmatprep.subr.mxu0 0.0
  %608 = vmatpush2.msra.mxu0 0.0
  %609 = vmatprep.subr.mxu0 0.0
  %610 = vmatpush2.msra.mxu0 0.0
  %611 = vmatprep.subr.mxu0 0.0
  %612 = vmatpush2.msra.mxu0 0.0
  %613 = vmatprep.mubr.f32.mxu0 0.0
  %614 = vmatmul.mubr.f32.gmra.mxu0 %v547
  %v615 = vpop.f32.mrf.mxu0
  %v616 = vadd.f32 0.0, %v615
  %v617 = vpop.f32.mrf.mxu0
  %618 = vdwg.mxu0
  %v620 = vsel %vm523, %v545, 0
  %622 = vmatprep.subr.mxu0 0.0
  %623 = vmatpush1.msra.mxu0 0.0
  %624 = vmatprep.subr.mxu0 0.0
  %625 = vmatpush1.msra.mxu0 0.0
  %626 = vmatprep.subr.mxu0 0.0
  %627 = vmatpush1.msra.mxu0 0.0
  %628 = vmatprep.subr.mxu0 0.0
  %629 = vmatpush1.msra.mxu0 0.0
  %630 = vmatprep.subr.mxu0 0.0
  %631 = vmatpush1.msra.mxu0 0.0
  %632 = vmatprep.subr.mxu0 0.0
  %633 = vmatpush1.msra.mxu0 0.0
  %634 = vmatprep.subr.mxu0 0.0
  %635 = vmatpush1.msra.mxu0 0.0
  %636 = vmatprep.subr.mxu0 0.0
  %637 = vmatpush1.msra.mxu0 0.0
  %638 = vmatprep.subr.mxu0 0.0
  %639 = vmatpush1.msra.mxu0 0.0
  %640 = vmatprep.subr.mxu0 0.0
  %641 = vmatpush1.msra.mxu0 0.0
  %642 = vmatprep.subr.mxu0 0.0
  %643 = vmatpush1.msra.mxu0 0.0
  %644 = vmatprep.subr.mxu0 0.0
  %645 = vmatpush1.msra.mxu0 0.0
  %646 = vmatprep.subr.mxu0 0.0
  %647 = vmatpush1.msra.mxu0 0.0
  %648 = vmatprep.subr.mxu0 0.0
  %649 = vmatpush1.msra.mxu0 0.0
  %650 = vmatprep.subr.mxu0 0.0
  %651 = vmatpush1.msra.mxu0 0.0
  %652 = vmatprep.subr.mxu0 0.0
  %653 = vmatpush1.msra.mxu0 %v122
  %654 = vmatprep.subr.mxu0 0.0
  %655 = vmatpush2.msra.mxu0 0.0
  %656 = vmatprep.subr.mxu0 0.0
  %657 = vmatpush2.msra.mxu0 0.0
  %658 = vmatprep.subr.mxu0 0.0
  %659 = vmatpush2.msra.mxu0 0.0
  %660 = vmatprep.subr.mxu0 0.0
  %661 = vmatpush2.msra.mxu0 0.0
  %662 = vmatprep.subr.mxu0 0.0
  %663 = vmatpush2.msra.mxu0 0.0
  %664 = vmatprep.subr.mxu0 0.0
  %665 = vmatpush2.msra.mxu0 0.0
  %666 = vmatprep.subr.mxu0 0.0
  %667 = vmatpush2.msra.mxu0 0.0
  %668 = vmatprep.subr.mxu0 0.0
  %669 = vmatpush2.msra.mxu0 0.0
  %670 = vmatprep.subr.mxu0 0.0
  %671 = vmatpush2.msra.mxu0 0.0
  %672 = vmatprep.subr.mxu0 0.0
  %673 = vmatpush2.msra.mxu0 0.0
  %674 = vmatprep.subr.mxu0 0.0
  %675 = vmatpush2.msra.mxu0 0.0
  %676 = vmatprep.subr.mxu0 0.0
  %677 = vmatpush2.msra.mxu0 0.0
  %678 = vmatprep.subr.mxu0 0.0
  %679 = vmatpush2.msra.mxu0 0.0
  %680 = vmatprep.subr.mxu0 0.0
  %681 = vmatpush2.msra.mxu0 0.0
  %682 = vmatprep.subr.mxu0 0.0
  %683 = vmatpush2.msra.mxu0 0.0
  %684 = vmatprep.subr.mxu0 0.0
  %685 = vmatpush2.msra.mxu0 0.0
  %686 = vmatprep.mubr.f32.mxu0 0.0
  %687 = vmatmul.mubr.f32.gmra.mxu0 %v620
  %v688 = vpop.f32.mrf.mxu0
  %v689 = vadd.f32 0.0, %v688
  %v690 = vpop.f32.mrf.mxu0
  %691 = vdwg.mxu0
  %692 = vrot.lane.b32.xlu0 %v369, 32
  %v693 = vpop.permute.xlu0 %692
  %694 = vrot.lane.b32.xlu0 %v370, 32
  %v695 = vpop.permute.xlu0 %694
  %v698 = vsel %vm123, %v616, %v693
  %v699 = vsel %vm123, %v689, %v695
  %vm700 = vcmask 523264
  %v702 = vsel %vm700, %v698, 0
  %v705 = vsel %vm700, %v699, 0
  %707 = vmatprep.subr.mxu0 0.0
  %708 = vmatpush1.msra.mxu0 0.0
  %709 = vmatprep.subr.mxu0 0.0
  %710 = vmatpush1.msra.mxu0 0.0
  %711 = vmatprep.subr.mxu0 0.0
  %712 = vmatpush1.msra.mxu0 0.0
  %713 = vmatprep.subr.mxu0 0.0
  %714 = vmatpush1.msra.mxu0 0.0
  %715 = vmatprep.subr.mxu0 0.0
  %716 = vmatpush1.msra.mxu0 0.0
  %717 = vmatprep.subr.mxu0 0.0
  %718 = vmatpush1.msra.mxu0 0.0
  %719 = vmatprep.subr.mxu0 0.0
  %720 = vmatpush1.msra.mxu0 0.0
  %721 = vmatprep.subr.mxu0 0.0
  %722 = vmatpush1.msra.mxu0 0.0
  %723 = vmatprep.subr.mxu0 0.0
  %724 = vmatpush1.msra.mxu0 %v280
  %725 = vmatprep.subr.mxu0 0.0
  %726 = vmatpush1.msra.mxu0 %v279
  %727 = vmatprep.subr.mxu0 0.0
  %728 = vmatpush1.msra.mxu0 %v278
  %729 = vmatprep.subr.mxu0 0.0
  %730 = vmatpush1.msra.mxu0 %v277
  %731 = vmatprep.subr.mxu0 0.0
  %732 = vmatpush1.msra.mxu0 %v276
  %733 = vmatprep.subr.mxu0 0.0
  %734 = vmatpush1.msra.mxu0 %v275
  %735 = vmatprep.subr.mxu0 0.0
  %736 = vmatpush1.msra.mxu0 %v274
  %737 = vmatprep.subr.mxu0 0.0
  %738 = vmatpush1.msra.mxu0 %v273
  %739 = vmatprep.subr.mxu0 0.0
  %740 = vmatpush2.msra.mxu0 0.0
  %741 = vmatprep.subr.mxu0 0.0
  %742 = vmatpush2.msra.mxu0 0.0
  %743 = vmatprep.subr.mxu0 0.0
  %744 = vmatpush2.msra.mxu0 0.0
  %745 = vmatprep.subr.mxu0 0.0
  %746 = vmatpush2.msra.mxu0 0.0
  %747 = vmatprep.subr.mxu0 0.0
  %748 = vmatpush2.msra.mxu0 0.0
  %749 = vmatprep.subr.mxu0 0.0
  %750 = vmatpush2.msra.mxu0 0.0
  %751 = vmatprep.subr.mxu0 0.0
  %752 = vmatpush2.msra.mxu0 0.0
  %753 = vmatprep.subr.mxu0 0.0
  %754 = vmatpush2.msra.mxu0 0.0
  %755 = vmatprep.subr.mxu0 0.0
  %756 = vmatpush2.msra.mxu0 0.0
  %757 = vmatprep.subr.mxu0 0.0
  %758 = vmatpush2.msra.mxu0 0.0
  %759 = vmatprep.subr.mxu0 0.0
  %760 = vmatpush2.msra.mxu0 0.0
  %761 = vmatprep.subr.mxu0 0.0
  %762 = vmatpush2.msra.mxu0 0.0
  %763 = vmatprep.subr.mxu0 0.0
  %764 = vmatpush2.msra.mxu0 0.0
  %765 = vmatprep.subr.mxu0 0.0
  %766 = vmatpush2.msra.mxu0 0.0
  %767 = vmatprep.subr.mxu0 0.0
  %768 = vmatpush2.msra.mxu0 0.0
  %769 = vmatprep.subr.mxu0 0.0
  %770 = vmatpush2.msra.mxu0 0.0
  %771 = vmatprep.mubr.f32.mxu0 0.0
  %772 = vmatmul.mubr.f32.gmra.mxu0 %v702
  %v773 = vpop.f32.mrf.mxu0
  %v774 = vadd.f32 0.0, %v773
  %v775 = vpop.f32.mrf.mxu0
  %776 = vmatprep.mubr.f32.mxu0 0.0
  %777 = vmatmul.mubr.f32.gmra.mxu0 %v705
  %v778 = vpop.f32.mrf.mxu0
  %v779 = vadd.f32 0.0, %v778
  %v780 = vpop.f32.mrf.mxu0
  %781 = vdwg.mxu0
  %v782 = vtanh.pop %v774
  %v783 = vtanh.pop %v779
  %v784 = vlaneseq
  %v785 = vshrl.u32 %v784, 7
  %v786 = vsub.s32 0, %v785
  %v787 = vrot.slane %v285, %v786
  %v789 = vsel %vm123, %v782, 0
  %v792 = vsel %vm123, %v783, 0
  %794 = vmatprep.subr.mxu0 0.0
  %795 = vmatpush1.msra.mxu0 0.0
  %796 = vmatprep.subr.mxu0 0.0
  %797 = vmatpush1.msra.mxu0 0.0
  %798 = vmatprep.subr.mxu0 0.0
  %799 = vmatpush1.msra.mxu0 0.0
  %800 = vmatprep.subr.mxu0 0.0
  %801 = vmatpush1.msra.mxu0 0.0
  %802 = vmatprep.subr.mxu0 0.0
  %803 = vmatpush1.msra.mxu0 0.0
  %804 = vmatprep.subr.mxu0 0.0
  %805 = vmatpush1.msra.mxu0 0.0
  %806 = vmatprep.subr.mxu0 0.0
  %807 = vmatpush1.msra.mxu0 0.0
  %808 = vmatprep.subr.mxu0 0.0
  %809 = vmatpush1.msra.mxu0 0.0
  %810 = vmatprep.subr.mxu0 0.0
  %811 = vmatpush1.msra.mxu0 0.0
  %812 = vmatprep.subr.mxu0 0.0
  %813 = vmatpush1.msra.mxu0 0.0
  %814 = vmatprep.subr.mxu0 0.0
  %815 = vmatpush1.msra.mxu0 0.0
  %816 = vmatprep.subr.mxu0 0.0
  %817 = vmatpush1.msra.mxu0 0.0
  %818 = vmatprep.subr.mxu0 0.0
  %819 = vmatpush1.msra.mxu0 %v284
  %820 = vmatprep.subr.mxu0 0.0
  %821 = vmatpush1.msra.mxu0 %v283
  %822 = vmatprep.subr.mxu0 0.0
  %823 = vmatpush1.msra.mxu0 %v282
  %824 = vmatprep.subr.mxu0 0.0
  %825 = vmatpush1.msra.mxu0 %v281
  %826 = vmatprep.subr.mxu0 0.0
  %827 = vmatpush2.msra.mxu0 0.0
  %828 = vmatprep.subr.mxu0 0.0
  %829 = vmatpush2.msra.mxu0 0.0
  %830 = vmatprep.subr.mxu0 0.0
  %831 = vmatpush2.msra.mxu0 0.0
  %832 = vmatprep.subr.mxu0 0.0
  %833 = vmatpush2.msra.mxu0 0.0
  %834 = vmatprep.subr.mxu0 0.0
  %835 = vmatpush2.msra.mxu0 0.0
  %836 = vmatprep.subr.mxu0 0.0
  %837 = vmatpush2.msra.mxu0 0.0
  %838 = vmatprep.subr.mxu0 0.0
  %839 = vmatpush2.msra.mxu0 0.0
  %840 = vmatprep.subr.mxu0 0.0
  %841 = vmatpush2.msra.mxu0 0.0
  %842 = vmatprep.subr.mxu0 0.0
  %843 = vmatpush2.msra.mxu0 0.0
  %844 = vmatprep.subr.mxu0 0.0
  %845 = vmatpush2.msra.mxu0 0.0
  %846 = vmatprep.subr.mxu0 0.0
  %847 = vmatpush2.msra.mxu0 0.0
  %848 = vmatprep.subr.mxu0 0.0
  %849 = vmatpush2.msra.mxu0 0.0
  %850 = vmatprep.subr.mxu0 0.0
  %851 = vmatpush2.msra.mxu0 0.0
  %852 = vmatprep.subr.mxu0 0.0
  %853 = vmatpush2.msra.mxu0 0.0
  %854 = vmatprep.subr.mxu0 0.0
  %855 = vmatpush2.msra.mxu0 0.0
  %856 = vmatprep.subr.mxu0 0.0
  %857 = vmatpush2.msra.mxu0 0.0
  %858 = vmatprep.mubr.f32.mxu0 0.0
  %859 = vmatmul.mubr.f32.gmra.mxu0 %v789
  %v860 = vpop.f32.mrf.mxu0
  %v861 = vadd.f32 %v787, %v860
  %v862 = vpop.f32.mrf.mxu0
  %863 = vmatprep.mubr.f32.mxu0 0.0
  %864 = vmatmul.mubr.f32.gmra.mxu0 %v792
  %v865 = vpop.f32.mrf.mxu0
  %v866 = vadd.f32 %v787, %v865
  %v867 = vpop.f32.mrf.mxu0
  %868 = vdwg.mxu0
  %869 = vmatprep.subr.mxu0 0.0
  %870 = vmatpush1.msra.mxu0 0.0
  %871 = vmatprep.subr.mxu0 0.0
  %872 = vmatpush1.msra.mxu0 0.0
  %873 = vmatprep.subr.mxu0 0.0
  %874 = vmatpush1.msra.mxu0 0.0
  %875 = vmatprep.subr.mxu0 0.0
  %876 = vmatpush1.msra.mxu0 0.0
  %877 = vmatprep.subr.mxu0 0.0
  %878 = vmatpush1.msra.mxu0 0.0
  %879 = vmatprep.subr.mxu0 0.0
  %880 = vmatpush1.msra.mxu0 0.0
  %881 = vmatprep.subr.mxu0 0.0
  %882 = vmatpush1.msra.mxu0 0.0
  %883 = vmatprep.subr.mxu0 0.0
  %884 = vmatpush1.msra.mxu0 0.0
  %885 = vmatprep.subr.mxu0 0.0
  %886 = vmatpush1.msra.mxu0 0.0
  %887 = vmatprep.subr.mxu0 0.0
  %888 = vmatpush1.msra.mxu0 0.0
  %889 = vmatprep.subr.mxu0 0.0
  %890 = vmatpush1.msra.mxu0 0.0
  %891 = vmatprep.subr.mxu0 0.0
  %892 = vmatpush1.msra.mxu0 0.0
  %893 = vmatprep.subr.mxu0 0.0
  %894 = vmatpush1.msra.mxu0 0.0
  %895 = vmatprep.subr.mxu0 0.0
  %896 = vmatpush1.msra.mxu0 0.0
  %897 = vmatprep.subr.mxu0 0.0
  %898 = vmatpush1.msra.mxu0 0.0
  %899 = vmatprep.subr.mxu0 0.0
  %900 = vmatpush1.msra.mxu0 %v268
  %901 = vmatprep.subr.mxu0 0.0
  %902 = vmatpush2.msra.mxu0 0.0
  %903 = vmatprep.subr.mxu0 0.0
  %904 = vmatpush2.msra.mxu0 0.0
  %905 = vmatprep.subr.mxu0 0.0
  %906 = vmatpush2.msra.mxu0 0.0
  %907 = vmatprep.subr.mxu0 0.0
  %908 = vmatpush2.msra.mxu0 0.0
  %909 = vmatprep.subr.mxu0 0.0
  %910 = vmatpush2.msra.mxu0 0.0
  %911 = vmatprep.subr.mxu0 0.0
  %912 = vmatpush2.msra.mxu0 0.0
  %913 = vmatprep.subr.mxu0 0.0
  %914 = vmatpush2.msra.mxu0 0.0
  %915 = vmatprep.subr.mxu0 0.0
  %916 = vmatpush2.msra.mxu0 0.0
  %917 = vmatprep.subr.mxu0 0.0
  %918 = vmatpush2.msra.mxu0 0.0
  %919 = vmatprep.subr.mxu0 0.0
  %920 = vmatpush2.msra.mxu0 0.0
  %921 = vmatprep.subr.mxu0 0.0
  %922 = vmatpush2.msra.mxu0 0.0
  %923 = vmatprep.subr.mxu0 0.0
  %924 = vmatpush2.msra.mxu0 0.0
  %925 = vmatprep.subr.mxu0 0.0
  %926 = vmatpush2.msra.mxu0 0.0
  %927 = vmatprep.subr.mxu0 0.0
  %928 = vmatpush2.msra.mxu0 0.0
  %929 = vmatprep.subr.mxu0 0.0
  %930 = vmatpush2.msra.mxu0 0.0
  %931 = vmatprep.subr.mxu0 0.0
  %932 = vmatpush2.msra.mxu0 0.0
  %933 = vmatprep.mubr.f32.mxu0 0.0
  %934 = vmatmul.mubr.f32.gmra.mxu0 %v547
  %v935 = vpop.f32.mrf.mxu0
  %v936 = vadd.f32 0.0, %v935
  %v937 = vpop.f32.mrf.mxu0
  %938 = vmatprep.mubr.f32.mxu0 0.0
  %939 = vmatmul.mubr.f32.gmra.mxu0 %v620
  %v940 = vpop.f32.mrf.mxu0
  %v941 = vadd.f32 0.0, %v940
  %v942 = vpop.f32.mrf.mxu0
  %943 = vdwg.mxu0
  %944 = vst [vmem:[%s7] sm:$0xff] %v861
  %945 = vst [vmem:[%s7 + $0x8] sm:$0xff] %v866
  %946 = vst [vmem:[%s8] sm:$0xff] %v936
  %947 = vst [vmem:[%s8 + $0x8] sm:$0xff] %v941
  %s948 = scalar_lea.vmem %s4, 32
  %v949 = vld [vmem:[%s948] sm:$0xff]
  %v950 = vld [vmem:[%s948 + $0x8] sm:$0xff]
  %v951 = vld [vmem:[%s948 + $0x10] sm:$0xff]
  %v952 = vld [vmem:[%s948 + $0x18] sm:$0xff]
  %s953 = scalar_lea.vmem %s5, 64
  %v954 = vld [vmem:[%s953] sm:$0xff]
  %v955 = vld [vmem:[%s953 + $0x8] sm:$0xff]
  %v956 = vld [vmem:[%s953 + $0x10] sm:$0xff]
  %v957 = vld [vmem:[%s953 + $0x18] sm:$0xff]
  %v958 = vld [vmem:[%s953 + $0x20] sm:$0xff]
  %v959 = vld [vmem:[%s953 + $0x28] sm:$0xff]
  %v960 = vld [vmem:[%s953 + $0x30] sm:$0xff]
  %v961 = vld [vmem:[%s953 + $0x38] sm:$0xff]
  %s962 = scalar_lea.vmem %s6, 40
  %v963 = vld [vmem:[%s962] sm:$0xff]
  %v964 = vld [vmem:[%s962 + $0x8] sm:$0xff]
  %v965 = vld [vmem:[%s962 + $0x10] sm:$0xff]
  %v966 = vld [vmem:[%s962 + $0x18] sm:$0xff]
  %v967 = vld [vmem:[%s962 + $0x20] sm:$0x1]
  %v969 = vsel %vm123, %v257, 0
  %v972 = vsel %vm123, %v262, 0
  %974 = vmatprep.subr.mxu0 0.0
  %975 = vmatpush1.msra.mxu0 0.0
  %976 = vmatprep.subr.mxu0 0.0
  %977 = vmatpush1.msra.mxu0 0.0
  %978 = vmatprep.subr.mxu0 0.0
  %979 = vmatpush1.msra.mxu0 0.0
  %980 = vmatprep.subr.mxu0 0.0
  %981 = vmatpush1.msra.mxu0 0.0
  %982 = vmatprep.subr.mxu0 0.0
  %983 = vmatpush1.msra.mxu0 0.0
  %984 = vmatprep.subr.mxu0 0.0
  %985 = vmatpush1.msra.mxu0 0.0
  %986 = vmatprep.subr.mxu0 0.0
  %987 = vmatpush1.msra.mxu0 0.0
  %988 = vmatprep.subr.mxu0 0.0
  %989 = vmatpush1.msra.mxu0 0.0
  %990 = vmatprep.subr.mxu0 0.0
  %991 = vmatpush1.msra.mxu0 0.0
  %992 = vmatprep.subr.mxu0 0.0
  %993 = vmatpush1.msra.mxu0 0.0
  %994 = vmatprep.subr.mxu0 0.0
  %995 = vmatpush1.msra.mxu0 0.0
  %996 = vmatprep.subr.mxu0 0.0
  %997 = vmatpush1.msra.mxu0 0.0
  %998 = vmatprep.subr.mxu0 0.0
  %999 = vmatpush1.msra.mxu0 %v952
  %1000 = vmatprep.subr.mxu0 0.0
  %1001 = vmatpush1.msra.mxu0 %v951
  %1002 = vmatprep.subr.mxu0 0.0
  %1003 = vmatpush1.msra.mxu0 %v950
  %1004 = vmatprep.subr.mxu0 0.0
  %1005 = vmatpush1.msra.mxu0 %v949
  %1006 = vmatprep.subr.mxu0 0.0
  %1007 = vmatpush2.msra.mxu0 0.0
  %1008 = vmatprep.subr.mxu0 0.0
  %1009 = vmatpush2.msra.mxu0 0.0
  %1010 = vmatprep.subr.mxu0 0.0
  %1011 = vmatpush2.msra.mxu0 0.0
  %1012 = vmatprep.subr.mxu0 0.0
  %1013 = vmatpush2.msra.mxu0 0.0
  %1014 = vmatprep.subr.mxu0 0.0
  %1015 = vmatpush2.msra.mxu0 0.0
  %1016 = vmatprep.subr.mxu0 0.0
  %1017 = vmatpush2.msra.mxu0 0.0
  %1018 = vmatprep.subr.mxu0 0.0
  %1019 = vmatpush2.msra.mxu0 0.0
  %1020 = vmatprep.subr.mxu0 0.0
  %1021 = vmatpush2.msra.mxu0 0.0
  %1022 = vmatprep.subr.mxu0 0.0
  %1023 = vmatpush2.msra.mxu0 0.0
  %1024 = vmatprep.subr.mxu0 0.0
  %1025 = vmatpush2.msra.mxu0 0.0
  %1026 = vmatprep.subr.mxu0 0.0
  %1027 = vmatpush2.msra.mxu0 0.0
  %1028 = vmatprep.subr.mxu0 0.0
  %1029 = vmatpush2.msra.mxu0 0.0
  %1030 = vmatprep.subr.mxu0 0.0
  %1031 = vmatpush2.msra.mxu0 0.0
  %1032 = vmatprep.subr.mxu0 0.0
  %1033 = vmatpush2.msra.mxu0 0.0
  %1034 = vmatprep.subr.mxu0 0.0
  %1035 = vmatpush2.msra.mxu0 0.0
  %1036 = vmatprep.subr.mxu0 0.0
  %1037 = vmatpush2.msra.mxu0 0.0
  %1038 = vmatprep.mubr.f32.mxu0 0.0
  %1039 = vmatmul.mubr.f32.gmra.mxu0 %v969
  %v1040 = vpop.f32.mrf.mxu0
  %v1041 = vadd.f32 0.0, %v1040
  %v1042 = vpop.f32.mrf.mxu0
  %1043 = vmatprep.mubr.f32.mxu0 0.0
  %1044 = vmatmul.mubr.f32.gmra.mxu0 %v972
  %v1045 = vpop.f32.mrf.mxu0
  %v1046 = vadd.f32 0.0, %v1045
  %v1047 = vpop.f32.mrf.mxu0
  %1048 = vdwg.mxu0
  %v1049 = vadd.f32 %v1041, %v138
  %v1050 = vadd.f32 %v1046, %v139
  %v1051 = vtanh.pop %v1049
  %v1052 = vtanh.pop %v1050
  %v1054 = vsel %vm123, %v1051, 0
  %1056 = vmatprep.subr.mxu0 0.0
  %1057 = vmatpush1.xpose.msra.mxu0 0.0
  %1058 = vmatprep.subr.mxu0 0.0
  %1059 = vmatpush1.xpose.msra.mxu0 0.0
  %1060 = vmatprep.subr.mxu0 0.0
  %1061 = vmatpush1.xpose.msra.mxu0 0.0
  %1062 = vmatprep.subr.mxu0 0.0
  %1063 = vmatpush1.xpose.msra.mxu0 0.0
  %1064 = vmatprep.subr.mxu0 0.0
  %1065 = vmatpush1.xpose.msra.mxu0 0.0
  %1066 = vmatprep.subr.mxu0 0.0
  %1067 = vmatpush1.xpose.msra.mxu0 0.0
  %1068 = vmatprep.subr.mxu0 0.0
  %1069 = vmatpush1.xpose.msra.mxu0 0.0
  %1070 = vmatprep.subr.mxu0 0.0
  %1071 = vmatpush1.xpose.msra.mxu0 0.0
  %1072 = vmatprep.subr.mxu0 0.0
  %1073 = vmatpush1.xpose.msra.mxu0 0.0
  %1074 = vmatprep.subr.mxu0 0.0
  %1075 = vmatpush1.xpose.msra.mxu0 0.0
  %1076 = vmatprep.subr.mxu0 0.0
  %1077 = vmatpush1.xpose.msra.mxu0 0.0
  %1078 = vmatprep.subr.mxu0 0.0
  %1079 = vmatpush1.xpose.msra.mxu0 0.0
  %1080 = vmatprep.subr.mxu0 0.0
  %1081 = vmatpush1.xpose.msra.mxu0 0.0
  %1082 = vmatprep.subr.mxu0 0.0
  %1083 = vmatpush1.xpose.msra.mxu0 0.0
  %1084 = vmatprep.subr.mxu0 0.0
  %1085 = vmatpush1.xpose.msra.mxu0 0.0
  %1086 = vmatprep.subr.mxu0 0.0
  %1087 = vmatpush1.xpose.msra.mxu0 %v375
  %1088 = vmatprep.subr.mxu0 0.0
  %1089 = vmatpush2.xpose.msra.mxu0 0.0
  %1090 = vmatprep.subr.mxu0 0.0
  %1091 = vmatpush2.xpose.msra.mxu0 0.0
  %1092 = vmatprep.subr.mxu0 0.0
  %1093 = vmatpush2.xpose.msra.mxu0 0.0
  %1094 = vmatprep.subr.mxu0 0.0
  %1095 = vmatpush2.xpose.msra.mxu0 0.0
  %1096 = vmatprep.subr.mxu0 0.0
  %1097 = vmatpush2.xpose.msra.mxu0 0.0
  %1098 = vmatprep.subr.mxu0 0.0
  %1099 = vmatpush2.xpose.msra.mxu0 0.0
  %1100 = vmatprep.subr.mxu0 0.0
  %1101 = vmatpush2.xpose.msra.mxu0 0.0
  %1102 = vmatprep.subr.mxu0 0.0
  %1103 = vmatpush2.xpose.msra.mxu0 0.0
  %1104 = vmatprep.subr.mxu0 0.0
  %1105 = vmatpush2.xpose.msra.mxu0 0.0
  %1106 = vmatprep.subr.mxu0 0.0
  %1107 = vmatpush2.xpose.msra.mxu0 0.0
  %1108 = vmatprep.subr.mxu0 0.0
  %1109 = vmatpush2.xpose.msra.mxu0 0.0
  %1110 = vmatprep.subr.mxu0 0.0
  %1111 = vmatpush2.xpose.msra.mxu0 0.0
  %1112 = vmatprep.subr.mxu0 0.0
  %1113 = vmatpush2.xpose.msra.mxu0 0.0
  %1114 = vmatprep.subr.mxu0 0.0
  %1115 = vmatpush2.xpose.msra.mxu0 0.0
  %1116 = vmatprep.subr.mxu0 0.0
  %1117 = vmatpush2.xpose.msra.mxu0 0.0
  %1118 = vmatprep.subr.mxu0 0.0
  %1119 = vmatpush2.xpose.msra.mxu0 0.0
  %1120 = vmatprep.mubr.f32.mxu0 0.0
  %1121 = vmatmul.mubr.f32.gmra.mxu0 %v1054
  %v1122 = vpop.f32.mrf.mxu0
  %v1123 = vadd.f32 0.0, %v1122
  %v1124 = vpop.f32.mrf.mxu0
  %1125 = vdwg.mxu0
  %v1127 = vsel %vm123, %v1052, 0
  %1129 = vmatprep.subr.mxu0 0.0
  %1130 = vmatpush1.xpose.msra.mxu0 0.0
  %1131 = vmatprep.subr.mxu0 0.0
  %1132 = vmatpush1.xpose.msra.mxu0 0.0
  %1133 = vmatprep.subr.mxu0 0.0
  %1134 = vmatpush1.xpose.msra.mxu0 0.0
  %1135 = vmatprep.subr.mxu0 0.0
  %1136 = vmatpush1.xpose.msra.mxu0 0.0
  %1137 = vmatprep.subr.mxu0 0.0
  %1138 = vmatpush1.xpose.msra.mxu0 0.0
  %1139 = vmatprep.subr.mxu0 0.0
  %1140 = vmatpush1.xpose.msra.mxu0 0.0
  %1141 = vmatprep.subr.mxu0 0.0
  %1142 = vmatpush1.xpose.msra.mxu0 0.0
  %1143 = vmatprep.subr.mxu0 0.0
  %1144 = vmatpush1.xpose.msra.mxu0 0.0
  %1145 = vmatprep.subr.mxu0 0.0
  %1146 = vmatpush1.xpose.msra.mxu0 0.0
  %1147 = vmatprep.subr.mxu0 0.0
  %1148 = vmatpush1.xpose.msra.mxu0 0.0
  %1149 = vmatprep.subr.mxu0 0.0
  %1150 = vmatpush1.xpose.msra.mxu0 0.0
  %1151 = vmatprep.subr.mxu0 0.0
  %1152 = vmatpush1.xpose.msra.mxu0 0.0
  %1153 = vmatprep.subr.mxu0 0.0
  %1154 = vmatpush1.xpose.msra.mxu0 0.0
  %1155 = vmatprep.subr.mxu0 0.0
  %1156 = vmatpush1.xpose.msra.mxu0 0.0
  %1157 = vmatprep.subr.mxu0 0.0
  %1158 = vmatpush1.xpose.msra.mxu0 0.0
  %1159 = vmatprep.subr.mxu0 0.0
  %1160 = vmatpush1.xpose.msra.mxu0 %v451
  %1161 = vmatprep.subr.mxu0 0.0
  %1162 = vmatpush2.xpose.msra.mxu0 0.0
  %1163 = vmatprep.subr.mxu0 0.0
  %1164 = vmatpush2.xpose.msra.mxu0 0.0
  %1165 = vmatprep.subr.mxu0 0.0
  %1166 = vmatpush2.xpose.msra.mxu0 0.0
  %1167 = vmatprep.subr.mxu0 0.0
  %1168 = vmatpush2.xpose.msra.mxu0 0.0
  %1169 = vmatprep.subr.mxu0 0.0
  %1170 = vmatpush2.xpose.msra.mxu0 0.0
  %1171 = vmatprep.subr.mxu0 0.0
  %1172 = vmatpush2.xpose.msra.mxu0 0.0
  %1173 = vmatprep.subr.mxu0 0.0
  %1174 = vmatpush2.xpose.msra.mxu0 0.0
  %1175 = vmatprep.subr.mxu0 0.0
  %1176 = vmatpush2.xpose.msra.mxu0 0.0
  %1177 = vmatprep.subr.mxu0 0.0
  %1178 = vmatpush2.xpose.msra.mxu0 0.0
  %1179 = vmatprep.subr.mxu0 0.0
  %1180 = vmatpush2.xpose.msra.mxu0 0.0
  %1181 = vmatprep.subr.mxu0 0.0
  %1182 = vmatpush2.xpose.msra.mxu0 0.0
  %1183 = vmatprep.subr.mxu0 0.0
  %1184 = vmatpush2.xpose.msra.mxu0 0.0
  %1185 = vmatprep.subr.mxu0 0.0
  %1186 = vmatpush2.xpose.msra.mxu0 0.0
  %1187 = vmatprep.subr.mxu0 0.0
  %1188 = vmatpush2.xpose.msra.mxu0 0.0
  %1189 = vmatprep.subr.mxu0 0.0
  %1190 = vmatpush2.xpose.msra.mxu0 0.0
  %1191 = vmatprep.subr.mxu0 0.0
  %1192 = vmatpush2.xpose.msra.mxu0 0.0
  %1193 = vmatprep.mubr.f32.mxu0 0.0
  %1194 = vmatmul.mubr.f32.gmra.mxu0 %v1127
  %v1195 = vpop.f32.mrf.mxu0
  %v1196 = vadd.f32 0.0, %v1195
  %v1197 = vpop.f32.mrf.mxu0
  %1198 = vdwg.mxu0
  %v1199 = vsel %vm523, %v1123, -inf
  %1200 = vmax.xlane.f32.xlu0 %v1199
  %v1201 = vpop.xlane.xlu0 %1200
  %v1202 = vsel %vm523, %v1196, -inf
  %1203 = vmax.xlane.f32.xlu0 %v1202
  %v1204 = vpop.xlane.xlu0 %1203
  %v1205 = vsub.f32 %v1123, %v1201
  %v1206 = vsub.f32 %v1196, %v1204
  %v1207 = vmul.f32 %v1205, 1.442695
  %v1208 = vpow.pop %v1207
  %v1209 = vmul.f32 %v1206, 1.442695
  %v1210 = vpow.pop %v1209
  %v1211 = vsel %vm523, %v1208, 0.0
  %1212 = vadd.xlane.f32.xlu0 %v1211
  %v1213 = vpop.xlane.xlu0 %1212
  %v1214 = vsel %vm523, %v1210, 0.0
  %1215 = vadd.xlane.f32.xlu0 %v1214
  %v1216 = vpop.xlane.xlu0 %1215
  %v1217 = vrcp.pop %v1213
  %v1218 = vmul.f32 %v1208, %v1217
  %v1219 = vrcp.pop %v1216
  %v1220 = vmul.f32 %v1210, %v1219
  %v1222 = vsel %vm523, %v1218, 0
  %1224 = vmatprep.subr.mxu0 0.0
  %1225 = vmatpush1.msra.mxu0 0.0
  %1226 = vmatprep.subr.mxu0 0.0
  %1227 = vmatpush1.msra.mxu0 0.0
  %1228 = vmatprep.subr.mxu0 0.0
  %1229 = vmatpush1.msra.mxu0 0.0
  %1230 = vmatprep.subr.mxu0 0.0
  %1231 = vmatpush1.msra.mxu0 0.0
  %1232 = vmatprep.subr.mxu0 0.0
  %1233 = vmatpush1.msra.mxu0 0.0
  %1234 = vmatprep.subr.mxu0 0.0
  %1235 = vmatpush1.msra.mxu0 0.0
  %1236 = vmatprep.subr.mxu0 0.0
  %1237 = vmatpush1.msra.mxu0 0.0
  %1238 = vmatprep.subr.mxu0 0.0
  %1239 = vmatpush1.msra.mxu0 0.0
  %1240 = vmatprep.subr.mxu0 0.0
  %1241 = vmatpush1.msra.mxu0 0.0
  %1242 = vmatprep.subr.mxu0 0.0
  %1243 = vmatpush1.msra.mxu0 0.0
  %1244 = vmatprep.subr.mxu0 0.0
  %1245 = vmatpush1.msra.mxu0 0.0
  %1246 = vmatprep.subr.mxu0 0.0
  %1247 = vmatpush1.msra.mxu0 0.0
  %1248 = vmatprep.subr.mxu0 0.0
  %1249 = vmatpush1.msra.mxu0 0.0
  %1250 = vmatprep.subr.mxu0 0.0
  %1251 = vmatpush1.msra.mxu0 0.0
  %1252 = vmatprep.subr.mxu0 0.0
  %1253 = vmatpush1.msra.mxu0 0.0
  %1254 = vmatprep.subr.mxu0 0.0
  %1255 = vmatpush1.msra.mxu0 %v121
  %1256 = vmatprep.subr.mxu0 0.0
  %1257 = vmatpush2.msra.mxu0 0.0
  %1258 = vmatprep.subr.mxu0 0.0
  %1259 = vmatpush2.msra.mxu0 0.0
  %1260 = vmatprep.subr.mxu0 0.0
  %1261 = vmatpush2.msra.mxu0 0.0
  %1262 = vmatprep.subr.mxu0 0.0
  %1263 = vmatpush2.msra.mxu0 0.0
  %1264 = vmatprep.subr.mxu0 0.0
  %1265 = vmatpush2.msra.mxu0 0.0
  %1266 = vmatprep.subr.mxu0 0.0
  %1267 = vmatpush2.msra.mxu0 0.0
  %1268 = vmatprep.subr.mxu0 0.0
  %1269 = vmatpush2.msra.mxu0 0.0
  %1270 = vmatprep.subr.mxu0 0.0
  %1271 = vmatpush2.msra.mxu0 0.0
  %1272 = vmatprep.subr.mxu0 0.0
  %1273 = vmatpush2.msra.mxu0 0.0
  %1274 = vmatprep.subr.mxu0 0.0
  %1275 = vmatpush2.msra.mxu0 0.0
  %1276 = vmatprep.subr.mxu0 0.0
  %1277 = vmatpush2.msra.mxu0 0.0
  %1278 = vmatprep.subr.mxu0 0.0
  %1279 = vmatpush2.msra.mxu0 0.0
  %1280 = vmatprep.subr.mxu0 0.0
  %1281 = vmatpush2.msra.mxu0 0.0
  %1282 = vmatprep.subr.mxu0 0.0
  %1283 = vmatpush2.msra.mxu0 0.0
  %1284 = vmatprep.subr.mxu0 0.0
  %1285 = vmatpush2.msra.mxu0 0.0
  %1286 = vmatprep.subr.mxu0 0.0
  %1287 = vmatpush2.msra.mxu0 0.0
  %1288 = vmatprep.mubr.f32.mxu0 0.0
  %1289 = vmatmul.mubr.f32.gmra.mxu0 %v1222
  %v1290 = vpop.f32.mrf.mxu0
  %v1291 = vadd.f32 0.0, %v1290
  %v1292 = vpop.f32.mrf.mxu0
  %1293 = vdwg.mxu0
  %v1295 = vsel %vm523, %v1220, 0
  %1297 = vmatprep.subr.mxu0 0.0
  %1298 = vmatpush1.msra.mxu0 0.0
  %1299 = vmatprep.subr.mxu0 0.0
  %1300 = vmatpush1.msra.mxu0 0.0
  %1301 = vmatprep.subr.mxu0 0.0
  %1302 = vmatpush1.msra.mxu0 0.0
  %1303 = vmatprep.subr.mxu0 0.0
  %1304 = vmatpush1.msra.mxu0 0.0
  %1305 = vmatprep.subr.mxu0 0.0
  %1306 = vmatpush1.msra.mxu0 0.0
  %1307 = vmatprep.subr.mxu0 0.0
  %1308 = vmatpush1.msra.mxu0 0.0
  %1309 = vmatprep.subr.mxu0 0.0
  %1310 = vmatpush1.msra.mxu0 0.0
  %1311 = vmatprep.subr.mxu0 0.0
  %1312 = vmatpush1.msra.mxu0 0.0
  %1313 = vmatprep.subr.mxu0 0.0
  %1314 = vmatpush1.msra.mxu0 0.0
  %1315 = vmatprep.subr.mxu0 0.0
  %1316 = vmatpush1.msra.mxu0 0.0
  %1317 = vmatprep.subr.mxu0 0.0
  %1318 = vmatpush1.msra.mxu0 0.0
  %1319 = vmatprep.subr.mxu0 0.0
  %1320 = vmatpush1.msra.mxu0 0.0
  %1321 = vmatprep.subr.mxu0 0.0
  %1322 = vmatpush1.msra.mxu0 0.0
  %1323 = vmatprep.subr.mxu0 0.0
  %1324 = vmatpush1.msra.mxu0 0.0
  %1325 = vmatprep.subr.mxu0 0.0
  %1326 = vmatpush1.msra.mxu0 0.0
  %1327 = vmatprep.subr.mxu0 0.0
  %1328 = vmatpush1.msra.mxu0 %v122
  %1329 = vmatprep.subr.mxu0 0.0
  %1330 = vmatpush2.msra.mxu0 0.0
  %1331 = vmatprep.subr.mxu0 0.0
  %1332 = vmatpush2.msra.mxu0 0.0
  %1333 = vmatprep.subr.mxu0 0.0
  %1334 = vmatpush2.msra.mxu0 0.0
  %1335 = vmatprep.subr.mxu0 0.0
  %1336 = vmatpush2.msra.mxu0 0.0
  %1337 = vmatprep.subr.mxu0 0.0
  %1338 = vmatpush2.msra.mxu0 0.0
  %1339 = vmatprep.subr.mxu0 0.0
  %1340 = vmatpush2.msra.mxu0 0.0
  %1341 = vmatprep.subr.mxu0 0.0
  %1342 = vmatpush2.msra.mxu0 0.0
  %1343 = vmatprep.subr.mxu0 0.0
  %1344 = vmatpush2.msra.mxu0 0.0
  %1345 = vmatprep.subr.mxu0 0.0
  %1346 = vmatpush2.msra.mxu0 0.0
  %1347 = vmatprep.subr.mxu0 0.0
  %1348 = vmatpush2.msra.mxu0 0.0
  %1349 = vmatprep.subr.mxu0 0.0
  %1350 = vmatpush2.msra.mxu0 0.0
  %1351 = vmatprep.subr.mxu0 0.0
  %1352 = vmatpush2.msra.mxu0 0.0
  %1353 = vmatprep.subr.mxu0 0.0
  %1354 = vmatpush2.msra.mxu0 0.0
  %1355 = vmatprep.subr.mxu0 0.0
  %1356 = vmatpush2.msra.mxu0 0.0
  %1357 = vmatprep.subr.mxu0 0.0
  %1358 = vmatpush2.msra.mxu0 0.0
  %1359 = vmatprep.subr.mxu0 0.0
  %1360 = vmatpush2.msra.mxu0 0.0
  %1361 = vmatprep.mubr.f32.mxu0 0.0
  %1362 = vmatmul.mubr.f32.gmra.mxu0 %v1295
  %v1363 = vpop.f32.mrf.mxu0
  %v1364 = vadd.f32 0.0, %v1363
  %v1365 = vpop.f32.mrf.mxu0
  %1366 = vdwg.mxu0
  %1367 = vrot.lane.b32.xlu0 %v1051, 32
  %v1368 = vpop.permute.xlu0 %1367
  %1369 = vrot.lane.b32.xlu0 %v1052, 32
  %v1370 = vpop.permute.xlu0 %1369
  %v1373 = vsel %vm123, %v1291, %v1368
  %v1374 = vsel %vm123, %v1364, %v1370
  %v1376 = vsel %vm700, %v1373, 0
  %v1379 = vsel %vm700, %v1374, 0
  %1381 = vmatprep.subr.mxu0 0.0
  %1382 = vmatpush1.msra.mxu0 0.0
  %1383 = vmatprep.subr.mxu0 0.0
  %1384 = vmatpush1.msra.mxu0 0.0
  %1385 = vmatprep.subr.mxu0 0.0
  %1386 = vmatpush1.msra.mxu0 0.0
  %1387 = vmatprep.subr.mxu0 0.0
  %1388 = vmatpush1.msra.mxu0 0.0
  %1389 = vmatprep.subr.mxu0 0.0
  %1390 = vmatpush1.msra.mxu0 0.0
  %1391 = vmatprep.subr.mxu0 0.0
  %1392 = vmatpush1.msra.mxu0 0.0
  %1393 = vmatprep.subr.mxu0 0.0
  %1394 = vmatpush1.msra.mxu0 0.0
  %1395 = vmatprep.subr.mxu0 0.0
  %1396 = vmatpush1.msra.mxu0 0.0
  %1397 = vmatprep.subr.mxu0 0.0
  %1398 = vmatpush1.msra.mxu0 %v961
  %1399 = vmatprep.subr.mxu0 0.0
  %1400 = vmatpush1.msra.mxu0 %v960
  %1401 = vmatprep.subr.mxu0 0.0
  %1402 = vmatpush1.msra.mxu0 %v959
  %1403 = vmatprep.subr.mxu0 0.0
  %1404 = vmatpush1.msra.mxu0 %v958
  %1405 = vmatprep.subr.mxu0 0.0
  %1406 = vmatpush1.msra.mxu0 %v957
  %1407 = vmatprep.subr.mxu0 0.0
  %1408 = vmatpush1.msra.mxu0 %v956
  %1409 = vmatprep.subr.mxu0 0.0
  %1410 = vmatpush1.msra.mxu0 %v955
  %1411 = vmatprep.subr.mxu0 0.0
  %1412 = vmatpush1.msra.mxu0 %v954
  %1413 = vmatprep.subr.mxu0 0.0
  %1414 = vmatpush2.msra.mxu0 0.0
  %1415 = vmatprep.subr.mxu0 0.0
  %1416 = vmatpush2.msra.mxu0 0.0
  %1417 = vmatprep.subr.mxu0 0.0
  %1418 = vmatpush2.msra.mxu0 0.0
  %1419 = vmatprep.subr.mxu0 0.0
  %1420 = vmatpush2.msra.mxu0 0.0
  %1421 = vmatprep.subr.mxu0 0.0
  %1422 = vmatpush2.msra.mxu0 0.0
  %1423 = vmatprep.subr.mxu0 0.0
  %1424 = vmatpush2.msra.mxu0 0.0
  %1425 = vmatprep.subr.mxu0 0.0
  %1426 = vmatpush2.msra.mxu0 0.0
  %1427 = vmatprep.subr.mxu0 0.0
  %1428 = vmatpush2.msra.mxu0 0.0
  %1429 = vmatprep.subr.mxu0 0.0
  %1430 = vmatpush2.msra.mxu0 0.0
  %1431 = vmatprep.subr.mxu0 0.0
  %1432 = vmatpush2.msra.mxu0 0.0
  %1433 = vmatprep.subr.mxu0 0.0
  %1434 = vmatpush2.msra.mxu0 0.0
  %1435 = vmatprep.subr.mxu0 0.0
  %1436 = vmatpush2.msra.mxu0 0.0
  %1437 = vmatprep.subr.mxu0 0.0
  %1438 = vmatpush2.msra.mxu0 0.0
  %1439 = vmatprep.subr.mxu0 0.0
  %1440 = vmatpush2.msra.mxu0 0.0
  %1441 = vmatprep.subr.mxu0 0.0
  %1442 = vmatpush2.msra.mxu0 0.0
  %1443 = vmatprep.subr.mxu0 0.0
  %1444 = vmatpush2.msra.mxu0 0.0
  %1445 = vmatprep.mubr.f32.mxu0 0.0
  %1446 = vmatmul.mubr.f32.gmra.mxu0 %v1376
  %v1447 = vpop.f32.mrf.mxu0
  %v1448 = vadd.f32 0.0, %v1447
  %v1449 = vpop.f32.mrf.mxu0
  %1450 = vmatprep.mubr.f32.mxu0 0.0
  %1451 = vmatmul.mubr.f32.gmra.mxu0 %v1379
  %v1452 = vpop.f32.mrf.mxu0
  %v1453 = vadd.f32 0.0, %v1452
  %v1454 = vpop.f32.mrf.mxu0
  %1455 = vdwg.mxu0
  %v1456 = vtanh.pop %v1448
  %v1457 = vtanh.pop %v1453
  %v1458 = vlaneseq
  %v1459 = vshrl.u32 %v1458, 7
  %v1460 = vsub.s32 0, %v1459
  %v1461 = vrot.slane %v967, %v1460
  %v1463 = vsel %vm123, %v1456, 0
  %v1466 = vsel %vm123, %v1457, 0
  %1468 = vmatprep.subr.mxu0 0.0
  %1469 = vmatpush1.msra.mxu0 0.0
  %1470 = vmatprep.subr.mxu0 0.0
  %1471 = vmatpush1.msra.mxu0 0.0
  %1472 = vmatprep.subr.mxu0 0.0
  %1473 = vmatpush1.msra.mxu0 0.0
  %1474 = vmatprep.subr.mxu0 0.0
  %1475 = vmatpush1.msra.mxu0 0.0
  %1476 = vmatprep.subr.mxu0 0.0
  %1477 = vmatpush1.msra.mxu0 0.0
  %1478 = vmatprep.subr.mxu0 0.0
  %1479 = vmatpush1.msra.mxu0 0.0
  %1480 = vmatprep.subr.mxu0 0.0
  %1481 = vmatpush1.msra.mxu0 0.0
  %1482 = vmatprep.subr.mxu0 0.0
  %1483 = vmatpush1.msra.mxu0 0.0
  %1484 = vmatprep.subr.mxu0 0.0
  %1485 = vmatpush1.msra.mxu0 0.0
  %1486 = vmatprep.subr.mxu0 0.0
  %1487 = vmatpush1.msra.mxu0 0.0
  %1488 = vmatprep.subr.mxu0 0.0
  %1489 = vmatpush1.msra.mxu0 0.0
  %1490 = vmatprep.subr.mxu0 0.0
  %1491 = vmatpush1.msra.mxu0 0.0
  %1492 = vmatprep.subr.mxu0 0.0
  %1493 = vmatpush1.msra.mxu0 %v966
  %1494 = vmatprep.subr.mxu0 0.0
  %1495 = vmatpush1.msra.mxu0 %v965
  %1496 = vmatprep.subr.mxu0 0.0
  %1497 = vmatpush1.msra.mxu0 %v964
  %1498 = vmatprep.subr.mxu0 0.0
  %1499 = vmatpush1.msra.mxu0 %v963
  %1500 = vmatprep.subr.mxu0 0.0
  %1501 = vmatpush2.msra.mxu0 0.0
  %1502 = vmatprep.subr.mxu0 0.0
  %1503 = vmatpush2.msra.mxu0 0.0
  %1504 = vmatprep.subr.mxu0 0.0
  %1505 = vmatpush2.msra.mxu0 0.0
  %1506 = vmatprep.subr.mxu0 0.0
  %1507 = vmatpush2.msra.mxu0 0.0
  %1508 = vmatprep.subr.mxu0 0.0
  %1509 = vmatpush2.msra.mxu0 0.0
  %1510 = vmatprep.subr.mxu0 0.0
  %1511 = vmatpush2.msra.mxu0 0.0
  %1512 = vmatprep.subr.mxu0 0.0
  %1513 = vmatpush2.msra.mxu0 0.0
  %1514 = vmatprep.subr.mxu0 0.0
  %1515 = vmatpush2.msra.mxu0 0.0
  %1516 = vmatprep.subr.mxu0 0.0
  %1517 = vmatpush2.msra.mxu0 0.0
  %1518 = vmatprep.subr.mxu0 0.0
  %1519 = vmatpush2.msra.mxu0 0.0
  %1520 = vmatprep.subr.mxu0 0.0
  %1521 = vmatpush2.msra.mxu0 0.0
  %1522 = vmatprep.subr.mxu0 0.0
  %1523 = vmatpush2.msra.mxu0 0.0
  %1524 = vmatprep.subr.mxu0 0.0
  %1525 = vmatpush2.msra.mxu0 0.0
  %1526 = vmatprep.subr.mxu0 0.0
  %1527 = vmatpush2.msra.mxu0 0.0
  %1528 = vmatprep.subr.mxu0 0.0
  %1529 = vmatpush2.msra.mxu0 0.0
  %1530 = vmatprep.subr.mxu0 0.0
  %1531 = vmatpush2.msra.mxu0 0.0
  %1532 = vmatprep.mubr.f32.mxu0 0.0
  %1533 = vmatmul.mubr.f32.gmra.mxu0 %v1463
  %v1534 = vpop.f32.mrf.mxu0
  %v1535 = vadd.f32 %v1461, %v1534
  %v1536 = vpop.f32.mrf.mxu0
  %1537 = vmatprep.mubr.f32.mxu0 0.0
  %1538 = vmatmul.mubr.f32.gmra.mxu0 %v1466
  %v1539 = vpop.f32.mrf.mxu0
  %v1540 = vadd.f32 %v1461, %v1539
  %v1541 = vpop.f32.mrf.mxu0
  %1542 = vdwg.mxu0
  %1543 = vmatprep.subr.mxu0 0.0
  %1544 = vmatpush1.msra.mxu0 0.0
  %1545 = vmatprep.subr.mxu0 0.0
  %1546 = vmatpush1.msra.mxu0 0.0
  %1547 = vmatprep.subr.mxu0 0.0
  %1548 = vmatpush1.msra.mxu0 0.0
  %1549 = vmatprep.subr.mxu0 0.0
  %1550 = vmatpush1.msra.mxu0 0.0
  %1551 = vmatprep.subr.mxu0 0.0
  %1552 = vmatpush1.msra.mxu0 0.0
  %1553 = vmatprep.subr.mxu0 0.0
  %1554 = vmatpush1.msra.mxu0 0.0
  %1555 = vmatprep.subr.mxu0 0.0
  %1556 = vmatpush1.msra.mxu0 0.0
  %1557 = vmatprep.subr.mxu0 0.0
  %1558 = vmatpush1.msra.mxu0 0.0
  %1559 = vmatprep.subr.mxu0 0.0
  %1560 = vmatpush1.msra.mxu0 0.0
  %1561 = vmatprep.subr.mxu0 0.0
  %1562 = vmatpush1.msra.mxu0 0.0
  %1563 = vmatprep.subr.mxu0 0.0
  %1564 = vmatpush1.msra.mxu0 0.0
  %1565 = vmatprep.subr.mxu0 0.0
  %1566 = vmatpush1.msra.mxu0 0.0
  %1567 = vmatprep.subr.mxu0 0.0
  %1568 = vmatpush1.msra.mxu0 0.0
  %1569 = vmatprep.subr.mxu0 0.0
  %1570 = vmatpush1.msra.mxu0 0.0
  %1571 = vmatprep.subr.mxu0 0.0
  %1572 = vmatpush1.msra.mxu0 0.0
  %1573 = vmatprep.subr.mxu0 0.0
  %1574 = vmatpush1.msra.mxu0 %v268
  %1575 = vmatprep.subr.mxu0 0.0
  %1576 = vmatpush2.msra.mxu0 0.0
  %1577 = vmatprep.subr.mxu0 0.0
  %1578 = vmatpush2.msra.mxu0 0.0
  %1579 = vmatprep.subr.mxu0 0.0
  %1580 = vmatpush2.msra.mxu0 0.0
  %1581 = vmatprep.subr.mxu0 0.0
  %1582 = vmatpush2.msra.mxu0 0.0
  %1583 = vmatprep.subr.mxu0 0.0
  %1584 = vmatpush2.msra.mxu0 0.0
  %1585 = vmatprep.subr.mxu0 0.0
  %1586 = vmatpush2.msra.mxu0 0.0
  %1587 = vmatprep.subr.mxu0 0.0
  %1588 = vmatpush2.msra.mxu0 0.0
  %1589 = vmatprep.subr.mxu0 0.0
  %1590 = vmatpush2.msra.mxu0 0.0
  %1591 = vmatprep.subr.mxu0 0.0
  %1592 = vmatpush2.msra.mxu0 0.0
  %1593 = vmatprep.subr.mxu0 0.0
  %1594 = vmatpush2.msra.mxu0 0.0
  %1595 = vmatprep.subr.mxu0 0.0
  %1596 = vmatpush2.msra.mxu0 0.0
  %1597 = vmatprep.subr.mxu0 0.0
  %1598 = vmatpush2.msra.mxu0 0.0
  %1599 = vmatprep.subr.mxu0 0.0
  %1600 = vmatpush2.msra.mxu0 0.0
  %1601 = vmatprep.subr.mxu0 0.0
  %1602 = vmatpush2.msra.mxu0 0.0
  %1603 = vmatprep.subr.mxu0 0.0
  %1604 = vmatpush2.msra.mxu0 0.0
  %1605 = vmatprep.subr.mxu0 0.0
  %1606 = vmatpush2.msra.mxu0 0.0
  %1607 = vmatprep.mubr.f32.mxu0 0.0
  %1608 = vmatmul.mubr.f32.gmra.mxu0 %v1222
  %v1609 = vpop.f32.mrf.mxu0
  %v1610 = vadd.f32 0.0, %v1609
  %v1611 = vpop.f32.mrf.mxu0
  %1612 = vmatprep.mubr.f32.mxu0 0.0
  %1613 = vmatmul.mubr.f32.gmra.mxu0 %v1295
  %v1614 = vpop.f32.mrf.mxu0
  %v1615 = vadd.f32 0.0, %v1614
  %v1616 = vpop.f32.mrf.mxu0
  %1617 = vdwg.mxu0
  %1618 = vst [vmem:[%s9] sm:$0xff] %v1535
  %1619 = vst [vmem:[%s9 + $0x8] sm:$0xff] %v1540
  %1620 = vst [vmem:[%s10] sm:$0xff] %v1610
  %1621 = vst [vmem:[%s10 + $0x8] sm:$0xff] %v1615
  // Predicated region
  $region30: #{_forward_main.1} parent=0 // pred_check
    _
  $region31: #{_forward_main.1} parent=0 // pred_check_branch
    %1623 = sbr.rel (0) target = $region33
  $region32: #{_forward_main.1} parent=0 // pred_region
    _
  $region33: #{_forward_main.1} parent=0 // pred_fallthru
    _
  // Predicated region
  $region34: #{_forward_main.1} parent=0 // pred_check
    _
  $region35: #{_forward_main.1} parent=0 // pred_check_branch
    %1625 = sbr.rel (0) target = $region37
  $region36: #{_forward_main.1} parent=0 // pred_region
    _
  $region37: #{_forward_main.1} parent=0 // pred_fallthru
    _
  // Predicated region
  $region38: #{_forward_main.1} parent=0 // pred_check
    _
  $region39: #{_forward_main.1} parent=0 // pred_check_branch
    %1627 = sbr.rel (0) target = $region41
  $region40: #{_forward_main.1} parent=0 // pred_region
    _
  $region41: #{_forward_main.1} parent=0 // pred_fallthru
    _
  // Predicated region
  $region42: #{_forward_main.1} parent=0 // pred_check
    _
  $region43: #{_forward_main.1} parent=0 // pred_check_branch
    %1629 = sbr.rel (0) target = $region45
  $region44: #{_forward_main.1} parent=0 // pred_region
    _
  $region45: #{_forward_main.1} parent=0 // pred_fallthru
    _
  // Predicated region
  $region46: #{_forward_main.1} parent=0 // pred_check
    _
  $region47: #{_forward_main.1} parent=0 // pred_check_branch
    %1631 = sbr.rel (0) target = $region49
  $region48: #{_forward_main.1} parent=0 // pred_region
    _
  $region49: #{_forward_main.1} parent=0 // pred_fallthru
    _
  // Predicated region
  $region50: #{_forward_main.1} parent=0 // pred_check
    _
  $region51: #{_forward_main.1} parent=0 // pred_check_branch
    %1633 = sbr.rel (0) target = $region53
  $region52: #{_forward_main.1} parent=0 // pred_region
    _
  $region53: #{_forward_main.1} parent=0 // pred_fallthru
    _
  // Predicated region
  $region54: #{_forward_main.1} parent=0 // pred_check
    _
  $region55: #{_forward_main.1} parent=0 // pred_check_branch
    %1635 = sbr.rel (0) target = $region57
  $region56: #{_forward_main.1} parent=0 // pred_region
    _
  $region57: #{_forward_main.1} parent=0 // pred_fallthru
    _
  // Predicated region
  $region58: #{_forward_main.1} parent=0 // pred_check
    _
  $region59: #{_forward_main.1} parent=0 // pred_check_branch
    %1637 = sbr.rel (0) target = $region61
  $region60: #{_forward_main.1} parent=0 // pred_region
    _
  $region61: #{_forward_main.1} parent=0 // pred_fallthru
    _

</llo_original>
